<compile_context>
chip_gen: v7x
topology: tpu7x:2x2x1
jax: 0.10.0
libtpu: 0.0.40
codegen_flags: <defaults>
</compile_context>

<pallas_src>
import numpy as np
import jax
import jax.numpy as jnp
from jax.experimental import pallas as pl
from jax.experimental.pallas import tpu as pltpu


def _round_up(x, m):
    return (x + m - 1) // m * m


def _aux_head_kernel(x_ref, wf_ref, t1_ref, w2_ref, t2_ref, wc_ref, bc_ref,
                     out_ref):
    """One batch tile of the auxiliary head.

    x_ref : (TN, 64*C)  bf16 input tile, flattening index (8h+w)*C + c
    wf_ref: (64*C, 512) bf16 fused pool+conv1 weight (1/25 and BN1 scale folded)
    t1_ref: (1, 512)    f32 BN1 shift, tiled over the 4 pooled positions
    w2_ref: (512, 768)  bf16 conv2 weight, rows p*128+c, BN2 scale folded
    t2_ref: (1, 768)    f32 BN2 shift
    wc_ref: (768, P)    bf16 classifier weight, zero-padded to P lanes
    bc_ref: (1, P)      f32 classifier bias, zero-padded
    out_ref:(TN, P)     f32 padded logits
    """
    xr = jnp.maximum(x_ref[...], 0.0)                        # ReLU (bf16, VPU)

    # Fused AvgPool(5,3) + 1x1 conv + BN1 scale: ONE MXU matmul producing the
    # 4 pooled positions already concatenated on lanes (column p*128 + o).
    h1 = jnp.dot(xr, wf_ref[...], preferred_element_type=jnp.float32)
    h1 = jnp.maximum(h1 + t1_ref[...], 0.0)                  # BN1 shift + ReLU

    # 2x2 conv2 (+ folded BN2 scale) as a single K=512 matmul.
    h2 = jnp.dot(h1.astype(jnp.bfloat16), w2_ref[...],
                 preferred_element_type=jnp.float32)
    h2 = jnp.maximum(h2 + t2_ref[...], 0.0)                  # BN2 shift + ReLU

    # Classifier into a lane-dense padded output block.
    out_ref[...] = (jnp.dot(h2.astype(jnp.bfloat16), wc_ref[...],
                            preferred_element_type=jnp.float32)
                    + bc_ref[...])


def _choose_batch_tile(n, c, ncp, batch_tile):
    """C-aware batch tile: largest multiple of 8 (<= batch_tile) such that the
    double-buffered bf16 x tile + f32 output tile + (conservatively
    double-buffered) weights stay under ~20 MiB of VMEM — safe below the
    32 MiB scoped limit on v6e/v7x and the raised limit we request on v5e.

    NOTE: on v7x (2 TensorCores) pass batch_tile <= N//2 (e.g. 64 for N<=128)
    so grid >= 2 and the "parallel" batch axis actually shards; on v5e/v6e
    (1 TC) the default 128 is best, and on v6e with N >= 256 batch_tile=256
    fills the 256-row MXU.
    """
    per_row = 2 * (64 * c * 2) + 2 * (ncp * 4)               # x (bf16) + out (f32)
    weights = 2 * (64 * c * 512 * 2 + 512 * 768 * 2 + 768 * ncp * 2
                   + (512 + 768 + ncp) * 4)
    budget = 20 * 1024 * 1024
    tn_cap = max(8, (max(budget - weights, 0) // per_row) // 8 * 8)
    return max(8, min(batch_tile, _round_up(n, 8), tn_cap))


def auxiliary_head_forward(x_nchw, params, *, batch_tile=128):
    """AuxiliaryHeadCIFAR forward.  x_nchw: (N, C, 8, 8) float32, NCHW."""
    n, c, h, w = x_nchw.shape
    assert (h, w) == (8, 8), "AuxiliaryHeadCIFAR assumes an 8x8 input"
    num_classes = params["num_classes"]
    ncp = params["wc"].shape[1]                  # classifier lanes (mult of 128)

    tn = _choose_batch_tile(n, c, ncp, batch_tile)
    n_pad = _round_up(n, tn)

    # Layout plumbing in plain JAX (one fused XLA op): NCHW -> lane-dense
    # (N, 64*C) bf16; zero-pad the batch to a whole number of tiles.
    xt = jnp.transpose(x_nchw, (0, 2, 3, 1)).reshape(n, 64 * c)
    xt = xt.astype(jnp.bfloat16)
    if n_pad != n:
        xt = jnp.pad(xt, ((0, n_pad - n), (0, 0)))

    out = pl.pallas_call(
        _aux_head_kernel,
        out_shape=jax.ShapeDtypeStruct((n_pad, ncp), jnp.float32),
        grid=(n_pad // tn,),
        in_specs=[
            pl.BlockSpec((tn, 64 * c), lambda i: (i, 0)),    # x tile (streamed)
            pl.BlockSpec((64 * c, 512), lambda i: (0, 0)),   # fused pool+conv1
            pl.BlockSpec((1, 512), lambda i: (0, 0)),        # t1 (tiled x4)
            pl.BlockSpec((512, 768), lambda i: (0, 0)),      # w2 (folded)
            pl.BlockSpec((1, 768), lambda i: (0, 0)),        # t2
            pl.BlockSpec((768, ncp), lambda i: (0, 0)),      # wc (padded)
            pl.BlockSpec((1, ncp), lambda i: (0, 0)),        # bc (padded)
        ],
        out_specs=pl.BlockSpec((tn, ncp), lambda i: (i, 0)),
        compiler_params=pltpu.CompilerParams(
            dimension_semantics=("parallel",),
            vmem_limit_bytes=32 * 1024 * 1024),
    )(xt, params["wf"], params["t1"], params["w2"], params["t2"],
      params["wc"], params["bc"])

    return out[:n, :num_classes]


def make_params(key, C, num_classes):
    eps = 1e-5
    ks = jax.random.split(key, 12)
    # PyTorch-layout parameters (deterministic synthetic init).
    w1_t = 0.1 * jax.random.normal(ks[0], (128, C, 1, 1), jnp.float32)
    w2_t = 0.1 * jax.random.normal(ks[1], (768, 128, 2, 2), jnp.float32)
    wc_t = 0.1 * jax.random.normal(ks[2], (num_classes, 768), jnp.float32)
    bc_t = 0.1 * jax.random.normal(ks[3], (num_classes,), jnp.float32)
    g1 = 1.0 + 0.1 * jax.random.normal(ks[4], (128,), jnp.float32)
    b1 = 0.1 * jax.random.normal(ks[5], (128,), jnp.float32)
    rm1 = 0.05 * jax.random.normal(ks[6], (128,), jnp.float32)
    rv1 = 1.0 + 0.1 * jax.random.uniform(ks[7], (128,), jnp.float32)
    g2 = 1.0 + 0.1 * jax.random.normal(ks[8], (768,), jnp.float32)
    b2 = 0.1 * jax.random.normal(ks[9], (768,), jnp.float32)
    rm2 = 0.05 * jax.random.normal(ks[10], (768,), jnp.float32)
    rv2 = 1.0 + 0.1 * jax.random.uniform(ks[11], (768,), jnp.float32)

    # Fold eval-mode BatchNorm into per-channel scale/shift.
    s1 = g1 / jnp.sqrt(rv1 + eps)
    t1 = b1 - rm1 * s1
    s2 = g2 / jnp.sqrt(rv2 + eps)
    t2 = b2 - rm2 * s2

    # 0/1 window-membership matrix for AvgPool2d(5, stride=3) on 8x8 -> 2x2.
    # Window p = 2*i + j starts at (3i, 3j); flattened spatial index k = 8h+w.
    pool = np.zeros((4, 64), np.float32)
    for p, (hs, ws) in enumerate(((0, 0), (0, 3), (3, 0), (3, 3))):
        for hh in range(hs, hs + 5):
            for ww in range(ws, ws + 5):
                pool[p, 8 * hh + ww] = 1.0
    pool = jnp.asarray(pool)

    # Fused pool + conv1 + BN1-scale weight:
    #   Wf[k*C + c, p*128 + o] = pool[p, k] * w1[o, c] * s1[o] / 25
    w1_sc = w1_t[:, :, 0, 0] * (s1 / 25.0)[:, None]                    # (128, C)
    wf = jnp.einsum("pk,oc->kcpo", pool, w1_sc).reshape(64 * C, 512)   # (64C,512)

    # conv2 rows ordered p*128 + c_in (matches Wf's column order), BN2 folded.
    w2_k = jnp.transpose(w2_t, (2, 3, 1, 0)).reshape(512, 768) * s2[None, :]

    # Classifier padded to a lane-dense multiple of 128 (any num_classes works;
    # the wrapper slices back to num_classes).
    ncp = _round_up(max(num_classes, 1), 128)
    wc_k = jnp.zeros((768, ncp), jnp.float32).at[:, :num_classes].set(wc_t.T)
    bc_k = jnp.zeros((1, ncp), jnp.float32).at[0, :num_classes].set(bc_t)

    return {
        "num_classes": num_classes,
        # kernel-layout parameters
        "wf": wf.astype(jnp.bfloat16),
        "t1": jnp.tile(t1, 4).reshape(1, 512),     # BN1 shift per pooled pos
        "w2": w2_k.astype(jnp.bfloat16),
        "t2": t2.reshape(1, 768),
        "wc": wc_k.astype(jnp.bfloat16),
        "bc": bc_k,
        # PyTorch-layout copies kept for the pure-JAX reference check
        "w1_t": w1_t, "w2_t": w2_t, "wc_t": wc_t, "bc_t": bc_t,
        "s1_v": s1, "t1_v": t1, "s2_v": s2, "t2_v": t2,
    }


def reference_forward(x, p):
    """Pure-JAX f32 reference following the PyTorch op sequence (NCHW)."""
    xr = jnp.maximum(x, 0.0)
    rows = []
    for i in range(2):
        cols = []
        for j in range(2):
            cols.append(jnp.mean(xr[:, :, 3 * i:3 * i + 5, 3 * j:3 * j + 5],
                                 axis=(2, 3)))
        rows.append(jnp.stack(cols, axis=-1))
    pooled = jnp.stack(rows, axis=-2)                                   # (N,C,2,2)
    h1 = jnp.einsum("nchw,oc->nohw", pooled, p["w1_t"][:, :, 0, 0])     # (N,128,2,2)
    h1 = jnp.maximum(h1 * p["s1_v"][None, :, None, None]
                     + p["t1_v"][None, :, None, None], 0.0)
    h2 = jnp.einsum("nchw,ochw->no", h1, p["w2_t"])                     # (N,768)
    h2 = jnp.maximum(h2 * p["s2_v"][None, :] + p["t2_v"][None, :], 0.0)
    return h2 @ p["wc_t"].T + p["bc_t"][None, :]


if __name__ == "__main__":
    N, C, NUM_CLASSES = 2, 4, 10
    key = jax.random.PRNGKey(0)
    kx, kp = jax.random.split(key)
    x = jax.random.normal(kx, (N, C, 8, 8), jnp.float32)   # NCHW, 8x8 as the module assumes
    params = make_params(kp, C, NUM_CLASSES)

    out = auxiliary_head_forward(x, params)
    out = jax.block_until_ready(out)

    ref = reference_forward(x, params)
    assert out.shape == (N, NUM_CLASSES)
    # bf16 inputs + bf16 MXU matmuls (f32 accumulation) vs an all-f32
    # reference -> loose tolerance.
    assert jnp.allclose(out, ref, atol=3e-2, rtol=3e-2), (out, ref)
    print("KERNEL_OK")
</pallas_src>

<mosaic_0001>
module attributes {stable_mosaic.version = 11 : i64} {
  func.func @_aux_head_kernel(%arg0: i32, %arg1: memref<8x256xbf16, #tpu.memory_space<vmem>>, %arg2: memref<256x512xbf16, #tpu.memory_space<vmem>>, %arg3: memref<1x512xf32, #tpu.memory_space<vmem>>, %arg4: memref<512x768xbf16, #tpu.memory_space<vmem>>, %arg5: memref<1x768xf32, #tpu.memory_space<vmem>>, %arg6: memref<768x128xbf16, #tpu.memory_space<vmem>>, %arg7: memref<1x128xf32, #tpu.memory_space<vmem>>, %arg8: memref<8x128xf32, #tpu.memory_space<vmem>>) attributes {dimension_semantics = [#tpu.dimension_semantics<parallel>], iteration_bounds = array<i64: 1>, scalar_prefetch = 0 : i64, scratch_operands = 0 : i64, tpu.core_type = #tpu.core_type<tc>, window_params = [{transform_indices = @transform_0, window_bounds = array<i64: 8, 256>}, {pipeline_mode = #tpu.pipeline_mode<synchronous>, transform_indices = @transform_1, window_bounds = array<i64: 256, 512>}, {pipeline_mode = #tpu.pipeline_mode<synchronous>, transform_indices = @transform_2, window_bounds = array<i64: 1, 512>}, {pipeline_mode = #tpu.pipeline_mode<synchronous>, transform_indices = @transform_3, window_bounds = array<i64: 512, 768>}, {pipeline_mode = #tpu.pipeline_mode<synchronous>, transform_indices = @transform_4, window_bounds = array<i64: 1, 768>}, {pipeline_mode = #tpu.pipeline_mode<synchronous>, transform_indices = @transform_5, window_bounds = array<i64: 768, 128>}, {pipeline_mode = #tpu.pipeline_mode<synchronous>, transform_indices = @transform_6, window_bounds = array<i64: 1, 128>}, {transform_indices = @transform_7, window_bounds = array<i64: 8, 128>}]} {
    %c0 = arith.constant 0 : index
    %c0_0 = arith.constant 0 : index
    %0 = vector.load %arg1[%c0, %c0_0] : memref<8x256xbf16, #tpu.memory_space<vmem>>, vector<8x256xbf16>
    %cst = arith.constant 0.000000e+00 : bf16
    %1 = vector.broadcast %cst : bf16 to vector<8x256xbf16>
    %2 = arith.maximumf %0, %1 : vector<8x256xbf16>
    %c0_1 = arith.constant 0 : index
    %c0_2 = arith.constant 0 : index
    %3 = vector.load %arg2[%c0_1, %c0_2] : memref<256x512xbf16, #tpu.memory_space<vmem>>, vector<256x512xbf16>
    %cst_3 = arith.constant dense<0.000000e+00> : vector<8x512xf32>
    %4 = tpu.matmul %2, %3, %cst_3 {dimension_numbers = #tpu.dot_dimension_numbers<[1], [0], [0], [1], [0, 0, 1, 1], [], []>} : vector<8x256xbf16>, vector<256x512xbf16>, vector<8x512xf32> -> vector<8x512xf32>
    %c0_4 = arith.constant 0 : index
    %c0_5 = arith.constant 0 : index
    %5 = vector.load %arg3[%c0_4, %c0_5] : memref<1x512xf32, #tpu.memory_space<vmem>>, vector<1x512xf32>
    %6 = vector.broadcast %5 : vector<1x512xf32> to vector<8x512xf32>
    %7 = arith.addf %4, %6 : vector<8x512xf32>
    %cst_6 = arith.constant 0.000000e+00 : f32
    %8 = vector.broadcast %cst_6 : f32 to vector<8x512xf32>
    %9 = arith.maximumf %7, %8 : vector<8x512xf32>
    %10 = arith.truncf %9 : vector<8x512xf32> to vector<8x512xbf16>
    %c0_7 = arith.constant 0 : index
    %c0_8 = arith.constant 0 : index
    %11 = vector.load %arg4[%c0_7, %c0_8] : memref<512x768xbf16, #tpu.memory_space<vmem>>, vector<512x768xbf16>
    %cst_9 = arith.constant dense<0.000000e+00> : vector<8x768xf32>
    %12 = tpu.matmul %10, %11, %cst_9 {dimension_numbers = #tpu.dot_dimension_numbers<[1], [0], [0], [1], [0, 0, 1, 1], [], []>} : vector<8x512xbf16>, vector<512x768xbf16>, vector<8x768xf32> -> vector<8x768xf32>
    %c0_10 = arith.constant 0 : index
    %c0_11 = arith.constant 0 : index
    %13 = vector.load %arg5[%c0_10, %c0_11] : memref<1x768xf32, #tpu.memory_space<vmem>>, vector<1x768xf32>
    %14 = vector.broadcast %13 : vector<1x768xf32> to vector<8x768xf32>
    %15 = arith.addf %12, %14 : vector<8x768xf32>
    %cst_12 = arith.constant 0.000000e+00 : f32
    %16 = vector.broadcast %cst_12 : f32 to vector<8x768xf32>
    %17 = arith.maximumf %15, %16 : vector<8x768xf32>
    %18 = arith.truncf %17 : vector<8x768xf32> to vector<8x768xbf16>
    %c0_13 = arith.constant 0 : index
    %c0_14 = arith.constant 0 : index
    %19 = vector.load %arg6[%c0_13, %c0_14] : memref<768x128xbf16, #tpu.memory_space<vmem>>, vector<768x128xbf16>
    %cst_15 = arith.constant dense<0.000000e+00> : vector<8x128xf32>
    %20 = tpu.matmul %18, %19, %cst_15 {dimension_numbers = #tpu.dot_dimension_numbers<[1], [0], [0], [1], [0, 0, 1, 1], [], []>} : vector<8x768xbf16>, vector<768x128xbf16>, vector<8x128xf32> -> vector<8x128xf32>
    %c0_16 = arith.constant 0 : index
    %c0_17 = arith.constant 0 : index
    %21 = vector.load %arg7[%c0_16, %c0_17] : memref<1x128xf32, #tpu.memory_space<vmem>>, vector<1x128xf32>
    %22 = vector.broadcast %21 : vector<1x128xf32> to vector<8x128xf32>
    %23 = arith.addf %20, %22 : vector<8x128xf32>
    %c0_18 = arith.constant 0 : index
    %c0_19 = arith.constant 0 : index
    %24 = vector.load %arg8[%c0_18, %c0_19] : memref<8x128xf32, #tpu.memory_space<vmem>>, vector<8x128xf32>
    tpu.vector_store %arg8[%c0_18, %c0_19], %23 {strides = array<i32>} : memref<8x128xf32, #tpu.memory_space<vmem>>, vector<8x128xf32>,
    return
  }
  func.func @transform_0(%arg0: i32) -> (i32, i32) {
    %c0_i32 = arith.constant 0 : i32
    %c0_i32_0 = arith.constant 0 : i32
    return %arg0, %c0_i32 : i32, i32
  }
  func.func @transform_1(%arg0: i32) -> (i32, i32) {
    %c0_i32 = arith.constant 0 : i32
    %c0_i32_0 = arith.constant 0 : i32
    %c0_i32_1 = arith.constant 0 : i32
    return %c0_i32, %c0_i32_0 : i32, i32
  }
  func.func @transform_2(%arg0: i32) -> (i32, i32) {
    %c0_i32 = arith.constant 0 : i32
    %c0_i32_0 = arith.constant 0 : i32
    %c0_i32_1 = arith.constant 0 : i32
    return %c0_i32, %c0_i32_0 : i32, i32
  }
  func.func @transform_3(%arg0: i32) -> (i32, i32) {
    %c0_i32 = arith.constant 0 : i32
    %c0_i32_0 = arith.constant 0 : i32
    %c0_i32_1 = arith.constant 0 : i32
    return %c0_i32, %c0_i32_0 : i32, i32
  }
  func.func @transform_4(%arg0: i32) -> (i32, i32) {
    %c0_i32 = arith.constant 0 : i32
    %c0_i32_0 = arith.constant 0 : i32
    %c0_i32_1 = arith.constant 0 : i32
    return %c0_i32, %c0_i32_0 : i32, i32
  }
  func.func @transform_5(%arg0: i32) -> (i32, i32) {
    %c0_i32 = arith.constant 0 : i32
    %c0_i32_0 = arith.constant 0 : i32
    %c0_i32_1 = arith.constant 0 : i32
    return %c0_i32, %c0_i32_0 : i32, i32
  }
  func.func @transform_6(%arg0: i32) -> (i32, i32) {
    %c0_i32 = arith.constant 0 : i32
    %c0_i32_0 = arith.constant 0 : i32
    %c0_i32_1 = arith.constant 0 : i32
    return %c0_i32, %c0_i32_0 : i32, i32
  }
  func.func @transform_7(%arg0: i32) -> (i32, i32) {
    %c0_i32 = arith.constant 0 : i32
    %c0_i32_0 = arith.constant 0 : i32
    return %arg0, %c0_i32 : i32, i32
  }
}

</mosaic_0001>

<llo_original>
// kernel: tpu_custom_call.1
$region0: #{tpu_custom_call.1}
  #allocation0 [shape = 'u32[]', space=smem, size = 0x4, offset = 0x4, fixed_abs, tag = 'smem constant byte address 0x4 - core index']
  #allocation1 [shape = 'u32[144,128]{1,0:T(1,128)}', space=vmem, size = 0x12000, scoped, tag = 'internal scratch']
  %s0 = inlined_call_operand.hbm [shape: bf16[8,256], index: 0, kind: input, shape index: {}]
  %s1 = inlined_call_operand.hbm [shape: bf16[256,512], index: 1, kind: input, shape index: {}]
  %s2 = inlined_call_operand.vmem [shape: f32[1,512], index: 2, kind: input, shape index: {}]
  %s3 = inlined_call_operand.hbm [shape: bf16[512,768], index: 3, kind: input, shape index: {}]
  %s4 = inlined_call_operand.vmem [shape: f32[1,768], index: 4, kind: input, shape index: {}]
  %s5 = inlined_call_operand.hbm [shape: bf16[768,128], index: 5, kind: input, shape index: {}]
  %s6 = inlined_call_operand.vmem [shape: f32[1,128], index: 6, kind: input, shape index: {}]
  %s7 = inlined_call_operand.hbm [shape: f32[8,128], index: 7, kind: output, shape index: {}]
  %s8 = sld [smem:[#allocation0]]
  $region54: #{tpu_custom_call.1} parent=0
    _
  %s10 = ssub.s32 1, %s8
  %s11 = scalar_select 0, %s10, %s8
  $region1: #{tpu_custom_call.1} parent=0
    #allocation2 [shape = 'u8[4096]{0}', space=vmem, size = 0x1000, scoped, tag = 'input window, operand 0, single buffered']
    #allocation3 [shape = 's32[1]{0}', space=sflag, size = 0x4, scoped, tag = 'scoped memory for tpu_custom_call.1']
    #allocation4 [shape = 's32[1]{0}', space=sflag, size = 0x4, scoped, tag = 'scoped memory for tpu_custom_call.1']
    #allocation5 [shape = 'u8[262144]{0}', space=vmem, size = 0x40000, scoped, tag = 'input window, operand 1, single buffered']
    #allocation6 [shape = 's32[1]{0}', space=sflag, size = 0x4, scoped, tag = 'scoped memory for tpu_custom_call.1']
    #allocation7 [shape = 'u8[786432]{0}', space=vmem, size = 0xc0000, scoped, tag = 'input window, operand 3, single buffered']
    #allocation8 [shape = 'u8[196608]{0}', space=vmem, size = 0x30000, scoped, tag = 'input window, operand 5, single buffered']
    #allocation9 [shape = 's32[1]{0}', space=sflag, size = 0x4, scoped, tag = 'scoped memory for tpu_custom_call.1']
    #allocation10 [shape = 'u8[4096]{0}', space=vmem, size = 0x1000, scoped, tag = 'output window, operand 0, single buffered']
    %12 = vsyncpa [#allocation3], 0
    %13 = vsyncpa [#allocation6], 0
    %14 = vsyncpa [#allocation9], 0
    %15 = vsyncpa [#allocation4], 0
    // Predicated region
    $region2: #{tpu_custom_call.1} parent=1 // pred_check
      _
    $region3: #{tpu_custom_call.1} parent=1 // pred_check_branch
      %17 = sbr.rel (0) target = $region5
    $region4: #{tpu_custom_call.1} parent=1 // pred_region
      %s19 = ssub.s32 128, 128
      %20 = vsyncadd [#allocation3], %s19
      %s22 = sshll.u32 [#allocation2], 4
      %s23 = int_to_ptr.vmem [resolvable:$true] %s22
      %25 = dma.hbm_to_vmem [thread:$0]  %s0, 128, %s23, [#allocation3]
    $region5: #{tpu_custom_call.1} parent=1 // pred_fallthru
      _
    // Predicated region
    $region6: #{tpu_custom_call.1} parent=1 // pred_check
      _
    $region7: #{tpu_custom_call.1} parent=1 // pred_check_branch
      %27 = sbr.rel (0) target = $region9
    $region8: #{tpu_custom_call.1} parent=1 // pred_region
      %s29 = ssub.s32 8192, 8192
      %30 = vsyncadd [#allocation6], %s29
      %s31 = sshll.u32 [#allocation5], 4
      %s32 = int_to_ptr.vmem [resolvable:$true] %s31
      %37 = dma.hbm_to_vmem [thread:$0]  %s1, 8192, %s32, [#allocation6], 256, 256, 16
    $region9: #{tpu_custom_call.1} parent=1 // pred_fallthru
      _
    // Predicated region
    $region10: #{tpu_custom_call.1} parent=1 // pred_check
      _
    $region11: #{tpu_custom_call.1} parent=1 // pred_check_branch
      %39 = sbr.rel (0) target = $region13
    $region12: #{tpu_custom_call.1} parent=1 // pred_region
      _
    $region13: #{tpu_custom_call.1} parent=1 // pred_fallthru
      _
    // Predicated region
    $region14: #{tpu_custom_call.1} parent=1 // pred_check
      _
    $region15: #{tpu_custom_call.1} parent=1 // pred_check_branch
      %41 = sbr.rel (0) target = $region17
    $region16: #{tpu_custom_call.1} parent=1 // pred_region
      %s43 = ssub.s32 24576, 24576
      %44 = vsyncadd [#allocation6], %s43
      %s45 = sshll.u32 [#allocation7], 4
      %s46 = int_to_ptr.vmem [resolvable:$true] %s45
      %51 = dma.hbm_to_vmem [thread:$0]  %s3, 24576, %s46, [#allocation6], 384, 384, 24
    $region17: #{tpu_custom_call.1} parent=1 // pred_fallthru
      _
    // Predicated region
    $region18: #{tpu_custom_call.1} parent=1 // pred_check
      _
    $region19: #{tpu_custom_call.1} parent=1 // pred_check_branch
      %53 = sbr.rel (0) target = $region21
    $region20: #{tpu_custom_call.1} parent=1 // pred_region
      _
    $region21: #{tpu_custom_call.1} parent=1 // pred_fallthru
      _
    // Predicated region
    $region22: #{tpu_custom_call.1} parent=1 // pred_check
      _
    $region23: #{tpu_custom_call.1} parent=1 // pred_check_branch
      %55 = sbr.rel (0) target = $region25
    $region24: #{tpu_custom_call.1} parent=1 // pred_region
      %s57 = ssub.s32 6144, 6144
      %58 = vsyncadd [#allocation9], %s57
      %s59 = sshll.u32 [#allocation8], 4
      %s60 = int_to_ptr.vmem [resolvable:$true] %s59
      %65 = dma.hbm_to_vmem [thread:$0]  %s5, 6144, %s60, [#allocation9], 64, 64, 4
    $region25: #{tpu_custom_call.1} parent=1 // pred_fallthru
      _
    // Predicated region
    $region26: #{tpu_custom_call.1} parent=1 // pred_check
      _
    $region27: #{tpu_custom_call.1} parent=1 // pred_check_branch
      %67 = sbr.rel (0) target = $region29
    $region28: #{tpu_custom_call.1} parent=1 // pred_region
      _
    $region29: #{tpu_custom_call.1} parent=1 // pred_fallthru
      _
    // Predicated region
    $region30: #{tpu_custom_call.1} parent=1 // pred_check
      _
    $region31: #{tpu_custom_call.1} parent=1 // pred_check_branch
      %69 = sbr.rel (0) target = $region33
    $region32: #{tpu_custom_call.1} parent=1 // pred_region
      %70 = dma.done [#allocation3], 128
    $region33: #{tpu_custom_call.1} parent=1 // pred_fallthru
      _
    // Predicated region
    $region34: #{tpu_custom_call.1} parent=1 // pred_check
      _
    $region35: #{tpu_custom_call.1} parent=1 // pred_check_branch
      %72 = sbr.rel (0) target = $region37
    $region36: #{tpu_custom_call.1} parent=1 // pred_region
      %73 = dma.done [#allocation6], 8192
    $region37: #{tpu_custom_call.1} parent=1 // pred_fallthru
      _
    // Predicated region
    $region38: #{tpu_custom_call.1} parent=1 // pred_check
      _
    $region39: #{tpu_custom_call.1} parent=1 // pred_check_branch
      %75 = sbr.rel (0) target = $region41
    $region40: #{tpu_custom_call.1} parent=1 // pred_region
      %76 = dma.done [#allocation6], 24576
    $region41: #{tpu_custom_call.1} parent=1 // pred_fallthru
      _
    // Predicated region
    $region42: #{tpu_custom_call.1} parent=1 // pred_check
      _
    $region43: #{tpu_custom_call.1} parent=1 // pred_check_branch
      %78 = sbr.rel (0) target = $region45
    $region44: #{tpu_custom_call.1} parent=1 // pred_region
      %79 = dma.done [#allocation9], 6144
    $region45: #{tpu_custom_call.1} parent=1 // pred_fallthru
      _
    %v81 = vld [vmem:[#allocation2] sm:$0xff]
    %v82 = vmax.bf16 %v81, 0
    %v83 = vld [vmem:[#allocation5] sm:$0xff]
    %v84 = vld [vmem:[#allocation5 + $0x8] sm:$0xff]
    %v85 = vld [vmem:[#allocation5 + $0x10] sm:$0xff]
    %v86 = vld [vmem:[#allocation5 + $0x18] sm:$0xff]
    %v87 = vld [vmem:[#allocation5 + $0x20] sm:$0xff]
    %v88 = vld [vmem:[#allocation5 + $0x28] sm:$0xff]
    %v89 = vld [vmem:[#allocation5 + $0x30] sm:$0xff]
    %v90 = vld [vmem:[#allocation5 + $0x38] sm:$0xff]
    %v91 = vld [vmem:[#allocation5 + $0x40] sm:$0xff]
    %v92 = vld [vmem:[#allocation5 + $0x48] sm:$0xff]
    %v93 = vld [vmem:[#allocation5 + $0x50] sm:$0xff]
    %v94 = vld [vmem:[#allocation5 + $0x58] sm:$0xff]
    %v95 = vld [vmem:[#allocation5 + $0x60] sm:$0xff]
    %v96 = vld [vmem:[#allocation5 + $0x68] sm:$0xff]
    %v97 = vld [vmem:[#allocation5 + $0x70] sm:$0xff]
    %v98 = vld [vmem:[#allocation5 + $0x78] sm:$0xff]
    %v99 = vld [vmem:[#allocation5 + $0x80] sm:$0xff]
    %v100 = vld [vmem:[#allocation5 + $0x88] sm:$0xff]
    %v101 = vld [vmem:[#allocation5 + $0x90] sm:$0xff]
    %v102 = vld [vmem:[#allocation5 + $0x98] sm:$0xff]
    %v103 = vld [vmem:[#allocation5 + $0xa0] sm:$0xff]
    %v104 = vld [vmem:[#allocation5 + $0xa8] sm:$0xff]
    %v105 = vld [vmem:[#allocation5 + $0xb0] sm:$0xff]
    %v106 = vld [vmem:[#allocation5 + $0xb8] sm:$0xff]
    %v107 = vld [vmem:[#allocation5 + $0xc0] sm:$0xff]
    %v108 = vld [vmem:[#allocation5 + $0xc8] sm:$0xff]
    %v109 = vld [vmem:[#allocation5 + $0xd0] sm:$0xff]
    %v110 = vld [vmem:[#allocation5 + $0xd8] sm:$0xff]
    %v111 = vld [vmem:[#allocation5 + $0xe0] sm:$0xff]
    %v112 = vld [vmem:[#allocation5 + $0xe8] sm:$0xff]
    %v113 = vld [vmem:[#allocation5 + $0xf0] sm:$0xff]
    %v114 = vld [vmem:[#allocation5 + $0xf8] sm:$0xff]
    %v115 = vld [vmem:[#allocation5 + $0x100] sm:$0xff]
    %v116 = vld [vmem:[#allocation5 + $0x108] sm:$0xff]
    %v117 = vld [vmem:[#allocation5 + $0x110] sm:$0xff]
    %v118 = vld [vmem:[#allocation5 + $0x118] sm:$0xff]
    %v119 = vld [vmem:[#allocation5 + $0x120] sm:$0xff]
    %v120 = vld [vmem:[#allocation5 + $0x128] sm:$0xff]
    %v121 = vld [vmem:[#allocation5 + $0x130] sm:$0xff]
    %v122 = vld [vmem:[#allocation5 + $0x138] sm:$0xff]
    %v123 = vld [vmem:[#allocation5 + $0x140] sm:$0xff]
    %v124 = vld [vmem:[#allocation5 + $0x148] sm:$0xff]
    %v125 = vld [vmem:[#allocation5 + $0x150] sm:$0xff]
    %v126 = vld [vmem:[#allocation5 + $0x158] sm:$0xff]
    %v127 = vld [vmem:[#allocation5 + $0x160] sm:$0xff]
    %v128 = vld [vmem:[#allocation5 + $0x168] sm:$0xff]
    %v129 = vld [vmem:[#allocation5 + $0x170] sm:$0xff]
    %v130 = vld [vmem:[#allocation5 + $0x178] sm:$0xff]
    %v131 = vld [vmem:[#allocation5 + $0x180] sm:$0xff]
    %v132 = vld [vmem:[#allocation5 + $0x188] sm:$0xff]
    %v133 = vld [vmem:[#allocation5 + $0x190] sm:$0xff]
    %v134 = vld [vmem:[#allocation5 + $0x198] sm:$0xff]
    %v135 = vld [vmem:[#allocation5 + $0x1a0] sm:$0xff]
    %v136 = vld [vmem:[#allocation5 + $0x1a8] sm:$0xff]
    %v137 = vld [vmem:[#allocation5 + $0x1b0] sm:$0xff]
    %v138 = vld [vmem:[#allocation5 + $0x1b8] sm:$0xff]
    %v139 = vld [vmem:[#allocation5 + $0x1c0] sm:$0xff]
    %v140 = vld [vmem:[#allocation5 + $0x1c8] sm:$0xff]
    %v141 = vld [vmem:[#allocation5 + $0x1d0] sm:$0xff]
    %v142 = vld [vmem:[#allocation5 + $0x1d8] sm:$0xff]
    %v143 = vld [vmem:[#allocation5 + $0x1e0] sm:$0xff]
    %v144 = vld [vmem:[#allocation5 + $0x1e8] sm:$0xff]
    %v145 = vld [vmem:[#allocation5 + $0x1f0] sm:$0xff]
    %v146 = vld [vmem:[#allocation5 + $0x1f8] sm:$0xff]
    %v147 = vld [vmem:[%s2] sm:$0xf]
    %v149 = vlaneseq
    %v150 = vshrl.u32 %v149, 7
    %v151 = vsub.s32 0, %v150
    %v152 = vrot.slane %v147, %v151
    %v153 = vlaneseq
    %v154 = vshrl.u32 %v153, 7
    %v155 = vsub.s32 1, %v154
    %v156 = vrot.slane %v147, %v155
    %v157 = vlaneseq
    %v158 = vshrl.u32 %v157, 7
    %v159 = vsub.s32 2, %v158
    %v160 = vrot.slane %v147, %v159
    %v161 = vlaneseq
    %v162 = vshrl.u32 %v161, 7
    %v163 = vsub.s32 3, %v162
    %v164 = vrot.slane %v147, %v163
    %v170 = vunpack.c.l.b16 %v82
    %v171 = vunpack.c.h.b16 %v82
    %v172 = vpack.c.b16 %v170, %v170
    %v173 = vpack.c.b16 %v171, %v171
    %v240 = vunpack.c.l.b16 %v83
    %v241 = vunpack.c.h.b16 %v83
    %v242 = vunpack.c.l.b16 %v84
    %v243 = vunpack.c.h.b16 %v84
    %v244 = vunpack.c.l.b16 %v85
    %v245 = vunpack.c.h.b16 %v85
    %v246 = vunpack.c.l.b16 %v86
    %v247 = vunpack.c.h.b16 %v86
    %v248 = vunpack.c.l.b16 %v87
    %v249 = vunpack.c.h.b16 %v87
    %v250 = vunpack.c.l.b16 %v88
    %v251 = vunpack.c.h.b16 %v88
    %v252 = vunpack.c.l.b16 %v89
    %v253 = vunpack.c.h.b16 %v89
    %v254 = vunpack.c.l.b16 %v90
    %v255 = vunpack.c.h.b16 %v90
    %v256 = vunpack.c.l.b16 %v91
    %v257 = vunpack.c.h.b16 %v91
    %v258 = vunpack.c.l.b16 %v92
    %v259 = vunpack.c.h.b16 %v92
    %v260 = vunpack.c.l.b16 %v93
    %v261 = vunpack.c.h.b16 %v93
    %v262 = vunpack.c.l.b16 %v94
    %v263 = vunpack.c.h.b16 %v94
    %v264 = vunpack.c.l.b16 %v95
    %v265 = vunpack.c.h.b16 %v95
    %v266 = vunpack.c.l.b16 %v96
    %v267 = vunpack.c.h.b16 %v96
    %v268 = vunpack.c.l.b16 %v97
    %v269 = vunpack.c.h.b16 %v97
    %v270 = vunpack.c.l.b16 %v98
    %v271 = vunpack.c.h.b16 %v98
    %v272 = vunpack.c.l.b16 %v99
    %v273 = vunpack.c.h.b16 %v99
    %v274 = vunpack.c.l.b16 %v100
    %v275 = vunpack.c.h.b16 %v100
    %v276 = vunpack.c.l.b16 %v101
    %v277 = vunpack.c.h.b16 %v101
    %v278 = vunpack.c.l.b16 %v102
    %v279 = vunpack.c.h.b16 %v102
    %v280 = vunpack.c.l.b16 %v103
    %v281 = vunpack.c.h.b16 %v103
    %v282 = vunpack.c.l.b16 %v104
    %v283 = vunpack.c.h.b16 %v104
    %v284 = vunpack.c.l.b16 %v105
    %v285 = vunpack.c.h.b16 %v105
    %v286 = vunpack.c.l.b16 %v106
    %v287 = vunpack.c.h.b16 %v106
    %v288 = vunpack.c.l.b16 %v107
    %v289 = vunpack.c.h.b16 %v107
    %v290 = vunpack.c.l.b16 %v108
    %v291 = vunpack.c.h.b16 %v108
    %v292 = vunpack.c.l.b16 %v109
    %v293 = vunpack.c.h.b16 %v109
    %v294 = vunpack.c.l.b16 %v110
    %v295 = vunpack.c.h.b16 %v110
    %v296 = vunpack.c.l.b16 %v111
    %v297 = vunpack.c.h.b16 %v111
    %v298 = vunpack.c.l.b16 %v112
    %v299 = vunpack.c.h.b16 %v112
    %v300 = vunpack.c.l.b16 %v113
    %v301 = vunpack.c.h.b16 %v113
    %v302 = vunpack.c.l.b16 %v114
    %v303 = vunpack.c.h.b16 %v114
    %v304 = vunpack.c.l.b16 %v115
    %v305 = vunpack.c.h.b16 %v115
    %v306 = vunpack.c.l.b16 %v116
    %v307 = vunpack.c.h.b16 %v116
    %v308 = vunpack.c.l.b16 %v117
    %v309 = vunpack.c.h.b16 %v117
    %v310 = vunpack.c.l.b16 %v118
    %v311 = vunpack.c.h.b16 %v118
    %v312 = vunpack.c.l.b16 %v119
    %v313 = vunpack.c.h.b16 %v119
    %v314 = vunpack.c.l.b16 %v120
    %v315 = vunpack.c.h.b16 %v120
    %v316 = vunpack.c.l.b16 %v121
    %v317 = vunpack.c.h.b16 %v121
    %v318 = vunpack.c.l.b16 %v122
    %v319 = vunpack.c.h.b16 %v122
    %v320 = vunpack.c.l.b16 %v123
    %v321 = vunpack.c.h.b16 %v123
    %v322 = vunpack.c.l.b16 %v124
    %v323 = vunpack.c.h.b16 %v124
    %v324 = vunpack.c.l.b16 %v125
    %v325 = vunpack.c.h.b16 %v125
    %v326 = vunpack.c.l.b16 %v126
    %v327 = vunpack.c.h.b16 %v126
    %v328 = vunpack.c.l.b16 %v127
    %v329 = vunpack.c.h.b16 %v127
    %v330 = vunpack.c.l.b16 %v128
    %v331 = vunpack.c.h.b16 %v128
    %v332 = vunpack.c.l.b16 %v129
    %v333 = vunpack.c.h.b16 %v129
    %v334 = vunpack.c.l.b16 %v130
    %v335 = vunpack.c.h.b16 %v130
    %v336 = vunpack.c.l.b16 %v131
    %v337 = vunpack.c.h.b16 %v131
    %v338 = vunpack.c.l.b16 %v132
    %v339 = vunpack.c.h.b16 %v132
    %v340 = vunpack.c.l.b16 %v133
    %v341 = vunpack.c.h.b16 %v133
    %v342 = vunpack.c.l.b16 %v134
    %v343 = vunpack.c.h.b16 %v134
    %v344 = vunpack.c.l.b16 %v135
    %v345 = vunpack.c.h.b16 %v135
    %v346 = vunpack.c.l.b16 %v136
    %v347 = vunpack.c.h.b16 %v136
    %v348 = vunpack.c.l.b16 %v137
    %v349 = vunpack.c.h.b16 %v137
    %v350 = vunpack.c.l.b16 %v138
    %v351 = vunpack.c.h.b16 %v138
    %v352 = vunpack.c.l.b16 %v139
    %v353 = vunpack.c.h.b16 %v139
    %v354 = vunpack.c.l.b16 %v140
    %v355 = vunpack.c.h.b16 %v140
    %v356 = vunpack.c.l.b16 %v141
    %v357 = vunpack.c.h.b16 %v141
    %v358 = vunpack.c.l.b16 %v142
    %v359 = vunpack.c.h.b16 %v142
    %v360 = vunpack.c.l.b16 %v143
    %v361 = vunpack.c.h.b16 %v143
    %v362 = vunpack.c.l.b16 %v144
    %v363 = vunpack.c.h.b16 %v144
    %v364 = vunpack.c.l.b16 %v145
    %v365 = vunpack.c.h.b16 %v145
    %v366 = vunpack.c.l.b16 %v146
    %v367 = vunpack.c.h.b16 %v146
    %v368 = vpack.c.b16 %v244, %v240
    %v369 = vpack.c.b16 %v245, %v241
    %v370 = vpack.c.b16 %v246, %v242
    %v371 = vpack.c.b16 %v247, %v243
    %v372 = vpack.c.b16 %v252, %v248
    %v373 = vpack.c.b16 %v253, %v249
    %v374 = vpack.c.b16 %v254, %v250
    %v375 = vpack.c.b16 %v255, %v251
    %v376 = vpack.c.b16 %v260, %v256
    %v377 = vpack.c.b16 %v261, %v257
    %v378 = vpack.c.b16 %v262, %v258
    %v379 = vpack.c.b16 %v263, %v259
    %v380 = vpack.c.b16 %v268, %v264
    %v381 = vpack.c.b16 %v269, %v265
    %v382 = vpack.c.b16 %v270, %v266
    %v383 = vpack.c.b16 %v271, %v267
    %v384 = vpack.c.b16 %v276, %v272
    %v385 = vpack.c.b16 %v277, %v273
    %v386 = vpack.c.b16 %v278, %v274
    %v387 = vpack.c.b16 %v279, %v275
    %v388 = vpack.c.b16 %v284, %v280
    %v389 = vpack.c.b16 %v285, %v281
    %v390 = vpack.c.b16 %v286, %v282
    %v391 = vpack.c.b16 %v287, %v283
    %v392 = vpack.c.b16 %v292, %v288
    %v393 = vpack.c.b16 %v293, %v289
    %v394 = vpack.c.b16 %v294, %v290
    %v395 = vpack.c.b16 %v295, %v291
    %v396 = vpack.c.b16 %v300, %v296
    %v397 = vpack.c.b16 %v301, %v297
    %v398 = vpack.c.b16 %v302, %v298
    %v399 = vpack.c.b16 %v303, %v299
    %v400 = vpack.c.b16 %v308, %v304
    %v401 = vpack.c.b16 %v309, %v305
    %v402 = vpack.c.b16 %v310, %v306
    %v403 = vpack.c.b16 %v311, %v307
    %v404 = vpack.c.b16 %v316, %v312
    %v405 = vpack.c.b16 %v317, %v313
    %v406 = vpack.c.b16 %v318, %v314
    %v407 = vpack.c.b16 %v319, %v315
    %v408 = vpack.c.b16 %v324, %v320
    %v409 = vpack.c.b16 %v325, %v321
    %v410 = vpack.c.b16 %v326, %v322
    %v411 = vpack.c.b16 %v327, %v323
    %v412 = vpack.c.b16 %v332, %v328
    %v413 = vpack.c.b16 %v333, %v329
    %v414 = vpack.c.b16 %v334, %v330
    %v415 = vpack.c.b16 %v335, %v331
    %v416 = vpack.c.b16 %v340, %v336
    %v417 = vpack.c.b16 %v341, %v337
    %v418 = vpack.c.b16 %v342, %v338
    %v419 = vpack.c.b16 %v343, %v339
    %v420 = vpack.c.b16 %v348, %v344
    %v421 = vpack.c.b16 %v349, %v345
    %v422 = vpack.c.b16 %v350, %v346
    %v423 = vpack.c.b16 %v351, %v347
    %v424 = vpack.c.b16 %v356, %v352
    %v425 = vpack.c.b16 %v357, %v353
    %v426 = vpack.c.b16 %v358, %v354
    %v427 = vpack.c.b16 %v359, %v355
    %v428 = vpack.c.b16 %v364, %v360
    %v429 = vpack.c.b16 %v365, %v361
    %v430 = vpack.c.b16 %v366, %v362
    %v431 = vpack.c.b16 %v367, %v363
    %496 = vmatprep.subr.bf16.mxu0 %v369
    %497 = vmatpush1.bf16.msra.mxu0 %v368
    %498 = vmatprep.subr.bf16.mxu0 %v373
    %499 = vmatpush1.bf16.msra.mxu0 %v372
    %500 = vmatprep.subr.bf16.mxu0 %v377
    %501 = vmatpush1.bf16.msra.mxu0 %v376
    %502 = vmatprep.subr.bf16.mxu0 %v381
    %503 = vmatpush1.bf16.msra.mxu0 %v380
    %504 = vmatprep.subr.bf16.mxu0 %v385
    %505 = vmatpush1.bf16.msra.mxu0 %v384
    %506 = vmatprep.subr.bf16.mxu0 %v389
    %507 = vmatpush1.bf16.msra.mxu0 %v388
    %508 = vmatprep.subr.bf16.mxu0 %v393
    %509 = vmatpush1.bf16.msra.mxu0 %v392
    %510 = vmatprep.subr.bf16.mxu0 %v397
    %511 = vmatpush1.bf16.msra.mxu0 %v396
    %512 = vmatprep.subr.bf16.mxu0 %v401
    %513 = vmatpush1.bf16.msra.mxu0 %v400
    %514 = vmatprep.subr.bf16.mxu0 %v405
    %515 = vmatpush1.bf16.msra.mxu0 %v404
    %516 = vmatprep.subr.bf16.mxu0 %v409
    %517 = vmatpush1.bf16.msra.mxu0 %v408
    %518 = vmatprep.subr.bf16.mxu0 %v413
    %519 = vmatpush1.bf16.msra.mxu0 %v412
    %520 = vmatprep.subr.bf16.mxu0 %v417
    %521 = vmatpush1.bf16.msra.mxu0 %v416
    %522 = vmatprep.subr.bf16.mxu0 %v421
    %523 = vmatpush1.bf16.msra.mxu0 %v420
    %524 = vmatprep.subr.bf16.mxu0 %v425
    %525 = vmatpush1.bf16.msra.mxu0 %v424
    %526 = vmatprep.subr.bf16.mxu0 %v429
    %527 = vmatpush1.bf16.msra.mxu0 %v428
    %528 = vmatprep.mubr.bf16.mxu0 %v173
    %529 = vmatmul.mubr.bf16.gmra.mrb[0].mxu0 %v172
    %v530 = vpop.f32.mrb[0].mxu0
    %v531 = vadd.f32 %v152, %v530
    %v532 = vpop.f32.mrb[0].mxu0
    %v533 = vadd.f32 %v156, %v532
    %v534 = vpop.f32.mrb[0].mxu0
    %v535 = vpop.f32.mrb[0].mxu0
    %536 = vdwg.mxu0
    %537 = vmatprep.subr.bf16.mxu0 %v371
    %538 = vmatpush1.bf16.msra.mxu0 %v370
    %539 = vmatprep.subr.bf16.mxu0 %v375
    %540 = vmatpush1.bf16.msra.mxu0 %v374
    %541 = vmatprep.subr.bf16.mxu0 %v379
    %542 = vmatpush1.bf16.msra.mxu0 %v378
    %543 = vmatprep.subr.bf16.mxu0 %v383
    %544 = vmatpush1.bf16.msra.mxu0 %v382
    %545 = vmatprep.subr.bf16.mxu0 %v387
    %546 = vmatpush1.bf16.msra.mxu0 %v386
    %547 = vmatprep.subr.bf16.mxu0 %v391
    %548 = vmatpush1.bf16.msra.mxu0 %v390
    %549 = vmatprep.subr.bf16.mxu0 %v395
    %550 = vmatpush1.bf16.msra.mxu0 %v394
    %551 = vmatprep.subr.bf16.mxu0 %v399
    %552 = vmatpush1.bf16.msra.mxu0 %v398
    %553 = vmatprep.subr.bf16.mxu0 %v403
    %554 = vmatpush1.bf16.msra.mxu0 %v402
    %555 = vmatprep.subr.bf16.mxu0 %v407
    %556 = vmatpush1.bf16.msra.mxu0 %v406
    %557 = vmatprep.subr.bf16.mxu0 %v411
    %558 = vmatpush1.bf16.msra.mxu0 %v410
    %559 = vmatprep.subr.bf16.mxu0 %v415
    %560 = vmatpush1.bf16.msra.mxu0 %v414
    %561 = vmatprep.subr.bf16.mxu0 %v419
    %562 = vmatpush1.bf16.msra.mxu0 %v418
    %563 = vmatprep.subr.bf16.mxu0 %v423
    %564 = vmatpush1.bf16.msra.mxu0 %v422
    %565 = vmatprep.subr.bf16.mxu0 %v427
    %566 = vmatpush1.bf16.msra.mxu0 %v426
    %567 = vmatprep.subr.bf16.mxu0 %v431
    %568 = vmatpush1.bf16.msra.mxu0 %v430
    %569 = vmatprep.mubr.bf16.mxu0 %v173
    %570 = vmatmul.mubr.bf16.gmra.mrb[0].mxu0 %v172
    %v571 = vpop.f32.mrb[0].mxu0
    %v572 = vadd.f32 %v160, %v571
    %v573 = vpop.f32.mrb[0].mxu0
    %v574 = vadd.f32 %v164, %v573
    %v575 = vpop.f32.mrb[0].mxu0
    %v576 = vpop.f32.mrb[0].mxu0
    %577 = vdwg.mxu0
    %v578 = vmax.f32 %v531, 0.0
    %v579 = vmax.f32 %v533, 0.0
    %v580 = vmax.f32 %v572, 0.0
    %v581 = vmax.f32 %v574, 0.0
    %v582 = vpack.c.bf16 %v578, %v578
    %v583 = vpack.c.bf16 %v579, %v579
    %v584 = vpack.c.bf16 %v580, %v580
    %v585 = vpack.c.bf16 %v581, %v581
    %v586 = vld [vmem:[#allocation7] sm:$0xff]
    %v587 = vld [vmem:[#allocation7 + $0x8] sm:$0xff]
    %v588 = vld [vmem:[#allocation7 + $0x10] sm:$0xff]
    %v589 = vld [vmem:[#allocation7 + $0x18] sm:$0xff]
    %v590 = vld [vmem:[#allocation7 + $0x20] sm:$0xff]
    %v591 = vld [vmem:[#allocation7 + $0x28] sm:$0xff]
    %v592 = vld [vmem:[#allocation7 + $0x30] sm:$0xff]
    %v593 = vld [vmem:[#allocation7 + $0x38] sm:$0xff]
    %v594 = vld [vmem:[#allocation7 + $0x40] sm:$0xff]
    %v595 = vld [vmem:[#allocation7 + $0x48] sm:$0xff]
    %v596 = vld [vmem:[#allocation7 + $0x50] sm:$0xff]
    %v597 = vld [vmem:[#allocation7 + $0x58] sm:$0xff]
    %v598 = vld [vmem:[#allocation7 + $0x60] sm:$0xff]
    %v599 = vld [vmem:[#allocation7 + $0x68] sm:$0xff]
    %v600 = vld [vmem:[#allocation7 + $0x70] sm:$0xff]
    %v601 = vld [vmem:[#allocation7 + $0x78] sm:$0xff]
    %v602 = vld [vmem:[#allocation7 + $0x80] sm:$0xff]
    %v603 = vld [vmem:[#allocation7 + $0x88] sm:$0xff]
    %v604 = vld [vmem:[#allocation7 + $0x90] sm:$0xff]
    %v605 = vld [vmem:[#allocation7 + $0x98] sm:$0xff]
    %v606 = vld [vmem:[#allocation7 + $0xa0] sm:$0xff]
    %v607 = vld [vmem:[#allocation7 + $0xa8] sm:$0xff]
    %v608 = vld [vmem:[#allocation7 + $0xb0] sm:$0xff]
    %v609 = vld [vmem:[#allocation7 + $0xb8] sm:$0xff]
    %v610 = vld [vmem:[#allocation7 + $0xc0] sm:$0xff]
    %v611 = vld [vmem:[#allocation7 + $0xc8] sm:$0xff]
    %v612 = vld [vmem:[#allocation7 + $0xd0] sm:$0xff]
    %v613 = vld [vmem:[#allocation7 + $0xd8] sm:$0xff]
    %v614 = vld [vmem:[#allocation7 + $0xe0] sm:$0xff]
    %v615 = vld [vmem:[#allocation7 + $0xe8] sm:$0xff]
    %v616 = vld [vmem:[#allocation7 + $0xf0] sm:$0xff]
    %v617 = vld [vmem:[#allocation7 + $0xf8] sm:$0xff]
    %v618 = vld [vmem:[#allocation7 + $0x100] sm:$0xff]
    %v619 = vld [vmem:[#allocation7 + $0x108] sm:$0xff]
    %v620 = vld [vmem:[#allocation7 + $0x110] sm:$0xff]
    %v621 = vld [vmem:[#allocation7 + $0x118] sm:$0xff]
    %v622 = vld [vmem:[#allocation7 + $0x120] sm:$0xff]
    %v623 = vld [vmem:[#allocation7 + $0x128] sm:$0xff]
    %v624 = vld [vmem:[#allocation7 + $0x130] sm:$0xff]
    %v625 = vld [vmem:[#allocation7 + $0x138] sm:$0xff]
    %v626 = vld [vmem:[#allocation7 + $0x140] sm:$0xff]
    %v627 = vld [vmem:[#allocation7 + $0x148] sm:$0xff]
    %v628 = vld [vmem:[#allocation7 + $0x150] sm:$0xff]
    %v629 = vld [vmem:[#allocation7 + $0x158] sm:$0xff]
    %v630 = vld [vmem:[#allocation7 + $0x160] sm:$0xff]
    %v631 = vld [vmem:[#allocation7 + $0x168] sm:$0xff]
    %v632 = vld [vmem:[#allocation7 + $0x170] sm:$0xff]
    %v633 = vld [vmem:[#allocation7 + $0x178] sm:$0xff]
    %v634 = vld [vmem:[#allocation7 + $0x180] sm:$0xff]
    %v635 = vld [vmem:[#allocation7 + $0x188] sm:$0xff]
    %v636 = vld [vmem:[#allocation7 + $0x190] sm:$0xff]
    %v637 = vld [vmem:[#allocation7 + $0x198] sm:$0xff]
    %v638 = vld [vmem:[#allocation7 + $0x1a0] sm:$0xff]
    %v639 = vld [vmem:[#allocation7 + $0x1a8] sm:$0xff]
    %v640 = vld [vmem:[#allocation7 + $0x1b0] sm:$0xff]
    %v641 = vld [vmem:[#allocation7 + $0x1b8] sm:$0xff]
    %v642 = vld [vmem:[#allocation7 + $0x1c0] sm:$0xff]
    %v643 = vld [vmem:[#allocation7 + $0x1c8] sm:$0xff]
    %v644 = vld [vmem:[#allocation7 + $0x1d0] sm:$0xff]
    %v645 = vld [vmem:[#allocation7 + $0x1d8] sm:$0xff]
    %v646 = vld [vmem:[#allocation7 + $0x1e0] sm:$0xff]
    %v647 = vld [vmem:[#allocation7 + $0x1e8] sm:$0xff]
    %v648 = vld [vmem:[#allocation7 + $0x1f0] sm:$0xff]
    %v649 = vld [vmem:[#allocation7 + $0x1f8] sm:$0xff]
    %v650 = vld [vmem:[#allocation7 + $0x200] sm:$0xff]
    %v651 = vld [vmem:[#allocation7 + $0x208] sm:$0xff]
    %v652 = vld [vmem:[#allocation7 + $0x210] sm:$0xff]
    %v653 = vld [vmem:[#allocation7 + $0x218] sm:$0xff]
    %v654 = vld [vmem:[#allocation7 + $0x220] sm:$0xff]
    %v655 = vld [vmem:[#allocation7 + $0x228] sm:$0xff]
    %v656 = vld [vmem:[#allocation7 + $0x230] sm:$0xff]
    %v657 = vld [vmem:[#allocation7 + $0x238] sm:$0xff]
    %v658 = vld [vmem:[#allocation7 + $0x240] sm:$0xff]
    %v659 = vld [vmem:[#allocation7 + $0x248] sm:$0xff]
    %v660 = vld [vmem:[#allocation7 + $0x250] sm:$0xff]
    %v661 = vld [vmem:[#allocation7 + $0x258] sm:$0xff]
    %v662 = vld [vmem:[#allocation7 + $0x260] sm:$0xff]
    %v663 = vld [vmem:[#allocation7 + $0x268] sm:$0xff]
    %v664 = vld [vmem:[#allocation7 + $0x270] sm:$0xff]
    %v665 = vld [vmem:[#allocation7 + $0x278] sm:$0xff]
    %v666 = vld [vmem:[#allocation7 + $0x280] sm:$0xff]
    %v667 = vld [vmem:[#allocation7 + $0x288] sm:$0xff]
    %v668 = vld [vmem:[#allocation7 + $0x290] sm:$0xff]
    %v669 = vld [vmem:[#allocation7 + $0x298] sm:$0xff]
    %v670 = vld [vmem:[#allocation7 + $0x2a0] sm:$0xff]
    %v671 = vld [vmem:[#allocation7 + $0x2a8] sm:$0xff]
    %v672 = vld [vmem:[#allocation7 + $0x2b0] sm:$0xff]
    %v673 = vld [vmem:[#allocation7 + $0x2b8] sm:$0xff]
    %v674 = vld [vmem:[#allocation7 + $0x2c0] sm:$0xff]
    %v675 = vld [vmem:[#allocation7 + $0x2c8] sm:$0xff]
    %v676 = vld [vmem:[#allocation7 + $0x2d0] sm:$0xff]
    %v677 = vld [vmem:[#allocation7 + $0x2d8] sm:$0xff]
    %v678 = vld [vmem:[#allocation7 + $0x2e0] sm:$0xff]
    %v679 = vld [vmem:[#allocation7 + $0x2e8] sm:$0xff]
    %v680 = vld [vmem:[#allocation7 + $0x2f0] sm:$0xff]
    %v681 = vld [vmem:[#allocation7 + $0x2f8] sm:$0xff]
    %v682 = vld [vmem:[#allocation7 + $0x300] sm:$0xff]
    %v683 = vld [vmem:[#allocation7 + $0x308] sm:$0xff]
    %v684 = vld [vmem:[#allocation7 + $0x310] sm:$0xff]
    %v685 = vld [vmem:[#allocation7 + $0x318] sm:$0xff]
    %v686 = vld [vmem:[#allocation7 + $0x320] sm:$0xff]
    %v687 = vld [vmem:[#allocation7 + $0x328] sm:$0xff]
    %v688 = vld [vmem:[#allocation7 + $0x330] sm:$0xff]
    %v689 = vld [vmem:[#allocation7 + $0x338] sm:$0xff]
    %v690 = vld [vmem:[#allocation7 + $0x340] sm:$0xff]
    %v691 = vld [vmem:[#allocation7 + $0x348] sm:$0xff]
    %v692 = vld [vmem:[#allocation7 + $0x350] sm:$0xff]
    %v693 = vld [vmem:[#allocation7 + $0x358] sm:$0xff]
    %v694 = vld [vmem:[#allocation7 + $0x360] sm:$0xff]
    %v695 = vld [vmem:[#allocation7 + $0x368] sm:$0xff]
    %v696 = vld [vmem:[#allocation7 + $0x370] sm:$0xff]
    %v697 = vld [vmem:[#allocation7 + $0x378] sm:$0xff]
    %v698 = vld [vmem:[#allocation7 + $0x380] sm:$0xff]
    %v699 = vld [vmem:[#allocation7 + $0x388] sm:$0xff]
    %v700 = vld [vmem:[#allocation7 + $0x390] sm:$0xff]
    %v701 = vld [vmem:[#allocation7 + $0x398] sm:$0xff]
    %v702 = vld [vmem:[#allocation7 + $0x3a0] sm:$0xff]
    %v703 = vld [vmem:[#allocation7 + $0x3a8] sm:$0xff]
    %v704 = vld [vmem:[#allocation7 + $0x3b0] sm:$0xff]
    %v705 = vld [vmem:[#allocation7 + $0x3b8] sm:$0xff]
    %v706 = vld [vmem:[#allocation7 + $0x3c0] sm:$0xff]
    %v707 = vld [vmem:[#allocation7 + $0x3c8] sm:$0xff]
    %v708 = vld [vmem:[#allocation7 + $0x3d0] sm:$0xff]
    %v709 = vld [vmem:[#allocation7 + $0x3d8] sm:$0xff]
    %v710 = vld [vmem:[#allocation7 + $0x3e0] sm:$0xff]
    %v711 = vld [vmem:[#allocation7 + $0x3e8] sm:$0xff]
    %v712 = vld [vmem:[#allocation7 + $0x3f0] sm:$0xff]
    %v713 = vld [vmem:[#allocation7 + $0x3f8] sm:$0xff]
    %v714 = vld [vmem:[#allocation7 + $0x400] sm:$0xff]
    %v715 = vld [vmem:[#allocation7 + $0x408] sm:$0xff]
    %v716 = vld [vmem:[#allocation7 + $0x410] sm:$0xff]
    %v717 = vld [vmem:[#allocation7 + $0x418] sm:$0xff]
    %v718 = vld [vmem:[#allocation7 + $0x420] sm:$0xff]
    %v719 = vld [vmem:[#allocation7 + $0x428] sm:$0xff]
    %v720 = vld [vmem:[#allocation7 + $0x430] sm:$0xff]
    %v721 = vld [vmem:[#allocation7 + $0x438] sm:$0xff]
    %v722 = vld [vmem:[#allocation7 + $0x440] sm:$0xff]
    %v723 = vld [vmem:[#allocation7 + $0x448] sm:$0xff]
    %v724 = vld [vmem:[#allocation7 + $0x450] sm:$0xff]
    %v725 = vld [vmem:[#allocation7 + $0x458] sm:$0xff]
    %v726 = vld [vmem:[#allocation7 + $0x460] sm:$0xff]
    %v727 = vld [vmem:[#allocation7 + $0x468] sm:$0xff]
    %v728 = vld [vmem:[#allocation7 + $0x470] sm:$0xff]
    %v729 = vld [vmem:[#allocation7 + $0x478] sm:$0xff]
    %v730 = vld [vmem:[#allocation7 + $0x480] sm:$0xff]
    %v731 = vld [vmem:[#allocation7 + $0x488] sm:$0xff]
    %v732 = vld [vmem:[#allocation7 + $0x490] sm:$0xff]
    %v733 = vld [vmem:[#allocation7 + $0x498] sm:$0xff]
    %v734 = vld [vmem:[#allocation7 + $0x4a0] sm:$0xff]
    %v735 = vld [vmem:[#allocation7 + $0x4a8] sm:$0xff]
    %v736 = vld [vmem:[#allocation7 + $0x4b0] sm:$0xff]
    %v737 = vld [vmem:[#allocation7 + $0x4b8] sm:$0xff]
    %v738 = vld [vmem:[#allocation7 + $0x4c0] sm:$0xff]
    %v739 = vld [vmem:[#allocation7 + $0x4c8] sm:$0xff]
    %v740 = vld [vmem:[#allocation7 + $0x4d0] sm:$0xff]
    %v741 = vld [vmem:[#allocation7 + $0x4d8] sm:$0xff]
    %v742 = vld [vmem:[#allocation7 + $0x4e0] sm:$0xff]
    %v743 = vld [vmem:[#allocation7 + $0x4e8] sm:$0xff]
    %v744 = vld [vmem:[#allocation7 + $0x4f0] sm:$0xff]
    %v745 = vld [vmem:[#allocation7 + $0x4f8] sm:$0xff]
    %v746 = vld [vmem:[#allocation7 + $0x500] sm:$0xff]
    %v747 = vld [vmem:[#allocation7 + $0x508] sm:$0xff]
    %v748 = vld [vmem:[#allocation7 + $0x510] sm:$0xff]
    %v749 = vld [vmem:[#allocation7 + $0x518] sm:$0xff]
    %v750 = vld [vmem:[#allocation7 + $0x520] sm:$0xff]
    %v751 = vld [vmem:[#allocation7 + $0x528] sm:$0xff]
    %v752 = vld [vmem:[#allocation7 + $0x530] sm:$0xff]
    %v753 = vld [vmem:[#allocation7 + $0x538] sm:$0xff]
    %v754 = vld [vmem:[#allocation7 + $0x540] sm:$0xff]
    %v755 = vld [vmem:[#allocation7 + $0x548] sm:$0xff]
    %v756 = vld [vmem:[#allocation7 + $0x550] sm:$0xff]
    %v757 = vld [vmem:[#allocation7 + $0x558] sm:$0xff]
    %v758 = vld [vmem:[#allocation7 + $0x560] sm:$0xff]
    %v759 = vld [vmem:[#allocation7 + $0x568] sm:$0xff]
    %v760 = vld [vmem:[#allocation7 + $0x570] sm:$0xff]
    %v761 = vld [vmem:[#allocation7 + $0x578] sm:$0xff]
    %v762 = vld [vmem:[#allocation7 + $0x580] sm:$0xff]
    %v763 = vld [vmem:[#allocation7 + $0x588] sm:$0xff]
    %v764 = vld [vmem:[#allocation7 + $0x590] sm:$0xff]
    %v765 = vld [vmem:[#allocation7 + $0x598] sm:$0xff]
    %v766 = vld [vmem:[#allocation7 + $0x5a0] sm:$0xff]
    %v767 = vld [vmem:[#allocation7 + $0x5a8] sm:$0xff]
    %v768 = vld [vmem:[#allocation7 + $0x5b0] sm:$0xff]
    %v769 = vld [vmem:[#allocation7 + $0x5b8] sm:$0xff]
    %v770 = vld [vmem:[#allocation7 + $0x5c0] sm:$0xff]
    %v771 = vld [vmem:[#allocation7 + $0x5c8] sm:$0xff]
    %v772 = vld [vmem:[#allocation7 + $0x5d0] sm:$0xff]
    %v773 = vld [vmem:[#allocation7 + $0x5d8] sm:$0xff]
    %v774 = vld [vmem:[#allocation7 + $0x5e0] sm:$0xff]
    %v775 = vld [vmem:[#allocation7 + $0x5e8] sm:$0xff]
    %v776 = vld [vmem:[#allocation7 + $0x5f0] sm:$0xff]
    %v777 = vld [vmem:[#allocation7 + $0x5f8] sm:$0xff]
    %v778 = vld [vmem:[%s4] sm:$0x3f]
    %v780 = vlaneseq
    %v781 = vshrl.u32 %v780, 7
    %v782 = vsub.s32 0, %v781
    %v783 = vrot.slane %v778, %v782
    %v784 = vlaneseq
    %v785 = vshrl.u32 %v784, 7
    %v786 = vsub.s32 1, %v785
    %v787 = vrot.slane %v778, %v786
    %v788 = vlaneseq
    %v789 = vshrl.u32 %v788, 7
    %v790 = vsub.s32 2, %v789
    %v791 = vrot.slane %v778, %v790
    %v792 = vlaneseq
    %v793 = vshrl.u32 %v792, 7
    %v794 = vsub.s32 3, %v793
    %v795 = vrot.slane %v778, %v794
    %v796 = vlaneseq
    %v797 = vshrl.u32 %v796, 7
    %v798 = vsub.s32 4, %v797
    %v799 = vrot.slane %v778, %v798
    %v800 = vlaneseq
    %v801 = vshrl.u32 %v800, 7
    %v802 = vsub.s32 5, %v801
    %v803 = vrot.slane %v778, %v802
    %v1002 = vunpack.c.l.b16 %v586
    %v1003 = vunpack.c.h.b16 %v586
    %v1004 = vunpack.c.l.b16 %v587
    %v1005 = vunpack.c.h.b16 %v587
    %v1006 = vunpack.c.l.b16 %v588
    %v1007 = vunpack.c.h.b16 %v588
    %v1008 = vunpack.c.l.b16 %v589
    %v1009 = vunpack.c.h.b16 %v589
    %v1010 = vunpack.c.l.b16 %v590
    %v1011 = vunpack.c.h.b16 %v590
    %v1012 = vunpack.c.l.b16 %v591
    %v1013 = vunpack.c.h.b16 %v591
    %v1014 = vunpack.c.l.b16 %v592
    %v1015 = vunpack.c.h.b16 %v592
    %v1016 = vunpack.c.l.b16 %v593
    %v1017 = vunpack.c.h.b16 %v593
    %v1018 = vunpack.c.l.b16 %v594
    %v1019 = vunpack.c.h.b16 %v594
    %v1020 = vunpack.c.l.b16 %v595
    %v1021 = vunpack.c.h.b16 %v595
    %v1022 = vunpack.c.l.b16 %v596
    %v1023 = vunpack.c.h.b16 %v596
    %v1024 = vunpack.c.l.b16 %v597
    %v1025 = vunpack.c.h.b16 %v597
    %v1026 = vunpack.c.l.b16 %v598
    %v1027 = vunpack.c.h.b16 %v598
    %v1028 = vunpack.c.l.b16 %v599
    %v1029 = vunpack.c.h.b16 %v599
    %v1030 = vunpack.c.l.b16 %v600
    %v1031 = vunpack.c.h.b16 %v600
    %v1032 = vunpack.c.l.b16 %v601
    %v1033 = vunpack.c.h.b16 %v601
    %v1034 = vunpack.c.l.b16 %v602
    %v1035 = vunpack.c.h.b16 %v602
    %v1036 = vunpack.c.l.b16 %v603
    %v1037 = vunpack.c.h.b16 %v603
    %v1038 = vunpack.c.l.b16 %v604
    %v1039 = vunpack.c.h.b16 %v604
    %v1040 = vunpack.c.l.b16 %v605
    %v1041 = vunpack.c.h.b16 %v605
    %v1042 = vunpack.c.l.b16 %v606
    %v1043 = vunpack.c.h.b16 %v606
    %v1044 = vunpack.c.l.b16 %v607
    %v1045 = vunpack.c.h.b16 %v607
    %v1046 = vunpack.c.l.b16 %v608
    %v1047 = vunpack.c.h.b16 %v608
    %v1048 = vunpack.c.l.b16 %v609
    %v1049 = vunpack.c.h.b16 %v609
    %v1050 = vunpack.c.l.b16 %v610
    %v1051 = vunpack.c.h.b16 %v610
    %v1052 = vunpack.c.l.b16 %v611
    %v1053 = vunpack.c.h.b16 %v611
    %v1054 = vunpack.c.l.b16 %v612
    %v1055 = vunpack.c.h.b16 %v612
    %v1056 = vunpack.c.l.b16 %v613
    %v1057 = vunpack.c.h.b16 %v613
    %v1058 = vunpack.c.l.b16 %v614
    %v1059 = vunpack.c.h.b16 %v614
    %v1060 = vunpack.c.l.b16 %v615
    %v1061 = vunpack.c.h.b16 %v615
    %v1062 = vunpack.c.l.b16 %v616
    %v1063 = vunpack.c.h.b16 %v616
    %v1064 = vunpack.c.l.b16 %v617
    %v1065 = vunpack.c.h.b16 %v617
    %v1066 = vunpack.c.l.b16 %v618
    %v1067 = vunpack.c.h.b16 %v618
    %v1068 = vunpack.c.l.b16 %v619
    %v1069 = vunpack.c.h.b16 %v619
    %v1070 = vunpack.c.l.b16 %v620
    %v1071 = vunpack.c.h.b16 %v620
    %v1072 = vunpack.c.l.b16 %v621
    %v1073 = vunpack.c.h.b16 %v621
    %v1074 = vunpack.c.l.b16 %v622
    %v1075 = vunpack.c.h.b16 %v622
    %v1076 = vunpack.c.l.b16 %v623
    %v1077 = vunpack.c.h.b16 %v623
    %v1078 = vunpack.c.l.b16 %v624
    %v1079 = vunpack.c.h.b16 %v624
    %v1080 = vunpack.c.l.b16 %v625
    %v1081 = vunpack.c.h.b16 %v625
    %v1082 = vunpack.c.l.b16 %v626
    %v1083 = vunpack.c.h.b16 %v626
    %v1084 = vunpack.c.l.b16 %v627
    %v1085 = vunpack.c.h.b16 %v627
    %v1086 = vunpack.c.l.b16 %v628
    %v1087 = vunpack.c.h.b16 %v628
    %v1088 = vunpack.c.l.b16 %v629
    %v1089 = vunpack.c.h.b16 %v629
    %v1090 = vunpack.c.l.b16 %v630
    %v1091 = vunpack.c.h.b16 %v630
    %v1092 = vunpack.c.l.b16 %v631
    %v1093 = vunpack.c.h.b16 %v631
    %v1094 = vunpack.c.l.b16 %v632
    %v1095 = vunpack.c.h.b16 %v632
    %v1096 = vunpack.c.l.b16 %v633
    %v1097 = vunpack.c.h.b16 %v633
    %v1098 = vunpack.c.l.b16 %v634
    %v1099 = vunpack.c.h.b16 %v634
    %v1100 = vunpack.c.l.b16 %v635
    %v1101 = vunpack.c.h.b16 %v635
    %v1102 = vunpack.c.l.b16 %v636
    %v1103 = vunpack.c.h.b16 %v636
    %v1104 = vunpack.c.l.b16 %v637
    %v1105 = vunpack.c.h.b16 %v637
    %v1106 = vunpack.c.l.b16 %v638
    %v1107 = vunpack.c.h.b16 %v638
    %v1108 = vunpack.c.l.b16 %v639
    %v1109 = vunpack.c.h.b16 %v639
    %v1110 = vunpack.c.l.b16 %v640
    %v1111 = vunpack.c.h.b16 %v640
    %v1112 = vunpack.c.l.b16 %v641
    %v1113 = vunpack.c.h.b16 %v641
    %v1114 = vunpack.c.l.b16 %v642
    %v1115 = vunpack.c.h.b16 %v642
    %v1116 = vunpack.c.l.b16 %v643
    %v1117 = vunpack.c.h.b16 %v643
    %v1118 = vunpack.c.l.b16 %v644
    %v1119 = vunpack.c.h.b16 %v644
    %v1120 = vunpack.c.l.b16 %v645
    %v1121 = vunpack.c.h.b16 %v645
    %v1122 = vunpack.c.l.b16 %v646
    %v1123 = vunpack.c.h.b16 %v646
    %v1124 = vunpack.c.l.b16 %v647
    %v1125 = vunpack.c.h.b16 %v647
    %v1126 = vunpack.c.l.b16 %v648
    %v1127 = vunpack.c.h.b16 %v648
    %v1128 = vunpack.c.l.b16 %v649
    %v1129 = vunpack.c.h.b16 %v649
    %v1130 = vunpack.c.l.b16 %v650
    %v1131 = vunpack.c.h.b16 %v650
    %v1132 = vunpack.c.l.b16 %v651
    %v1133 = vunpack.c.h.b16 %v651
    %v1134 = vunpack.c.l.b16 %v652
    %v1135 = vunpack.c.h.b16 %v652
    %v1136 = vunpack.c.l.b16 %v653
    %v1137 = vunpack.c.h.b16 %v653
    %v1138 = vunpack.c.l.b16 %v654
    %v1139 = vunpack.c.h.b16 %v654
    %v1140 = vunpack.c.l.b16 %v655
    %v1141 = vunpack.c.h.b16 %v655
    %v1142 = vunpack.c.l.b16 %v656
    %v1143 = vunpack.c.h.b16 %v656
    %v1144 = vunpack.c.l.b16 %v657
    %v1145 = vunpack.c.h.b16 %v657
    %v1146 = vunpack.c.l.b16 %v658
    %v1147 = vunpack.c.h.b16 %v658
    %v1148 = vunpack.c.l.b16 %v659
    %v1149 = vunpack.c.h.b16 %v659
    %v1150 = vunpack.c.l.b16 %v660
    %v1151 = vunpack.c.h.b16 %v660
    %v1152 = vunpack.c.l.b16 %v661
    %v1153 = vunpack.c.h.b16 %v661
    %v1154 = vunpack.c.l.b16 %v662
    %v1155 = vunpack.c.h.b16 %v662
    %v1156 = vunpack.c.l.b16 %v663
    %v1157 = vunpack.c.h.b16 %v663
    %v1158 = vunpack.c.l.b16 %v664
    %v1159 = vunpack.c.h.b16 %v664
    %v1160 = vunpack.c.l.b16 %v665
    %v1161 = vunpack.c.h.b16 %v665
    %v1162 = vunpack.c.l.b16 %v666
    %v1163 = vunpack.c.h.b16 %v666
    %v1164 = vunpack.c.l.b16 %v667
    %v1165 = vunpack.c.h.b16 %v667
    %v1166 = vunpack.c.l.b16 %v668
    %v1167 = vunpack.c.h.b16 %v668
    %v1168 = vunpack.c.l.b16 %v669
    %v1169 = vunpack.c.h.b16 %v669
    %v1170 = vunpack.c.l.b16 %v670
    %v1171 = vunpack.c.h.b16 %v670
    %v1172 = vunpack.c.l.b16 %v671
    %v1173 = vunpack.c.h.b16 %v671
    %v1174 = vunpack.c.l.b16 %v672
    %v1175 = vunpack.c.h.b16 %v672
    %v1176 = vunpack.c.l.b16 %v673
    %v1177 = vunpack.c.h.b16 %v673
    %v1178 = vunpack.c.l.b16 %v674
    %v1179 = vunpack.c.h.b16 %v674
    %v1180 = vunpack.c.l.b16 %v675
    %v1181 = vunpack.c.h.b16 %v675
    %v1182 = vunpack.c.l.b16 %v676
    %v1183 = vunpack.c.h.b16 %v676
    %v1184 = vunpack.c.l.b16 %v677
    %v1185 = vunpack.c.h.b16 %v677
    %v1186 = vunpack.c.l.b16 %v678
    %v1187 = vunpack.c.h.b16 %v678
    %v1188 = vunpack.c.l.b16 %v679
    %v1189 = vunpack.c.h.b16 %v679
    %v1190 = vunpack.c.l.b16 %v680
    %v1191 = vunpack.c.h.b16 %v680
    %v1192 = vunpack.c.l.b16 %v681
    %v1193 = vunpack.c.h.b16 %v681
    %v1194 = vunpack.c.l.b16 %v682
    %v1195 = vunpack.c.h.b16 %v682
    %v1196 = vunpack.c.l.b16 %v683
    %v1197 = vunpack.c.h.b16 %v683
    %v1198 = vunpack.c.l.b16 %v684
    %v1199 = vunpack.c.h.b16 %v684
    %v1200 = vunpack.c.l.b16 %v685
    %v1201 = vunpack.c.h.b16 %v685
    %v1202 = vunpack.c.l.b16 %v686
    %v1203 = vunpack.c.h.b16 %v686
    %v1204 = vunpack.c.l.b16 %v687
    %v1205 = vunpack.c.h.b16 %v687
    %v1206 = vunpack.c.l.b16 %v688
    %v1207 = vunpack.c.h.b16 %v688
    %v1208 = vunpack.c.l.b16 %v689
    %v1209 = vunpack.c.h.b16 %v689
    %v1210 = vunpack.c.l.b16 %v690
    %v1211 = vunpack.c.h.b16 %v690
    %v1212 = vunpack.c.l.b16 %v691
    %v1213 = vunpack.c.h.b16 %v691
    %v1214 = vunpack.c.l.b16 %v692
    %v1215 = vunpack.c.h.b16 %v692
    %v1216 = vunpack.c.l.b16 %v693
    %v1217 = vunpack.c.h.b16 %v693
    %v1218 = vunpack.c.l.b16 %v694
    %v1219 = vunpack.c.h.b16 %v694
    %v1220 = vunpack.c.l.b16 %v695
    %v1221 = vunpack.c.h.b16 %v695
    %v1222 = vunpack.c.l.b16 %v696
    %v1223 = vunpack.c.h.b16 %v696
    %v1224 = vunpack.c.l.b16 %v697
    %v1225 = vunpack.c.h.b16 %v697
    %v1226 = vunpack.c.l.b16 %v698
    %v1227 = vunpack.c.h.b16 %v698
    %v1228 = vunpack.c.l.b16 %v699
    %v1229 = vunpack.c.h.b16 %v699
    %v1230 = vunpack.c.l.b16 %v700
    %v1231 = vunpack.c.h.b16 %v700
    %v1232 = vunpack.c.l.b16 %v701
    %v1233 = vunpack.c.h.b16 %v701
    %v1234 = vunpack.c.l.b16 %v702
    %v1235 = vunpack.c.h.b16 %v702
    %v1236 = vunpack.c.l.b16 %v703
    %v1237 = vunpack.c.h.b16 %v703
    %v1238 = vunpack.c.l.b16 %v704
    %v1239 = vunpack.c.h.b16 %v704
    %v1240 = vunpack.c.l.b16 %v705
    %v1241 = vunpack.c.h.b16 %v705
    %v1242 = vunpack.c.l.b16 %v706
    %v1243 = vunpack.c.h.b16 %v706
    %v1244 = vunpack.c.l.b16 %v707
    %v1245 = vunpack.c.h.b16 %v707
    %v1246 = vunpack.c.l.b16 %v708
    %v1247 = vunpack.c.h.b16 %v708
    %v1248 = vunpack.c.l.b16 %v709
    %v1249 = vunpack.c.h.b16 %v709
    %v1250 = vunpack.c.l.b16 %v710
    %v1251 = vunpack.c.h.b16 %v710
    %v1252 = vunpack.c.l.b16 %v711
    %v1253 = vunpack.c.h.b16 %v711
    %v1254 = vunpack.c.l.b16 %v712
    %v1255 = vunpack.c.h.b16 %v712
    %v1256 = vunpack.c.l.b16 %v713
    %v1257 = vunpack.c.h.b16 %v713
    %v1258 = vunpack.c.l.b16 %v714
    %v1259 = vunpack.c.h.b16 %v714
    %v1260 = vunpack.c.l.b16 %v715
    %v1261 = vunpack.c.h.b16 %v715
    %v1262 = vunpack.c.l.b16 %v716
    %v1263 = vunpack.c.h.b16 %v716
    %v1264 = vunpack.c.l.b16 %v717
    %v1265 = vunpack.c.h.b16 %v717
    %v1266 = vunpack.c.l.b16 %v718
    %v1267 = vunpack.c.h.b16 %v718
    %v1268 = vunpack.c.l.b16 %v719
    %v1269 = vunpack.c.h.b16 %v719
    %v1270 = vunpack.c.l.b16 %v720
    %v1271 = vunpack.c.h.b16 %v720
    %v1272 = vunpack.c.l.b16 %v721
    %v1273 = vunpack.c.h.b16 %v721
    %v1274 = vunpack.c.l.b16 %v722
    %v1275 = vunpack.c.h.b16 %v722
    %v1276 = vunpack.c.l.b16 %v723
    %v1277 = vunpack.c.h.b16 %v723
    %v1278 = vunpack.c.l.b16 %v724
    %v1279 = vunpack.c.h.b16 %v724
    %v1280 = vunpack.c.l.b16 %v725
    %v1281 = vunpack.c.h.b16 %v725
    %v1282 = vunpack.c.l.b16 %v726
    %v1283 = vunpack.c.h.b16 %v726
    %v1284 = vunpack.c.l.b16 %v727
    %v1285 = vunpack.c.h.b16 %v727
    %v1286 = vunpack.c.l.b16 %v728
    %v1287 = vunpack.c.h.b16 %v728
    %v1288 = vunpack.c.l.b16 %v729
    %v1289 = vunpack.c.h.b16 %v729
    %v1290 = vunpack.c.l.b16 %v730
    %v1291 = vunpack.c.h.b16 %v730
    %v1292 = vunpack.c.l.b16 %v731
    %v1293 = vunpack.c.h.b16 %v731
    %v1294 = vunpack.c.l.b16 %v732
    %v1295 = vunpack.c.h.b16 %v732
    %v1296 = vunpack.c.l.b16 %v733
    %v1297 = vunpack.c.h.b16 %v733
    %v1298 = vunpack.c.l.b16 %v734
    %v1299 = vunpack.c.h.b16 %v734
    %v1300 = vunpack.c.l.b16 %v735
    %v1301 = vunpack.c.h.b16 %v735
    %v1302 = vunpack.c.l.b16 %v736
    %v1303 = vunpack.c.h.b16 %v736
    %v1304 = vunpack.c.l.b16 %v737
    %v1305 = vunpack.c.h.b16 %v737
    %v1306 = vunpack.c.l.b16 %v738
    %v1307 = vunpack.c.h.b16 %v738
    %v1308 = vunpack.c.l.b16 %v739
    %v1309 = vunpack.c.h.b16 %v739
    %v1310 = vunpack.c.l.b16 %v740
    %v1311 = vunpack.c.h.b16 %v740
    %v1312 = vunpack.c.l.b16 %v741
    %v1313 = vunpack.c.h.b16 %v741
    %v1314 = vunpack.c.l.b16 %v742
    %v1315 = vunpack.c.h.b16 %v742
    %v1316 = vunpack.c.l.b16 %v743
    %v1317 = vunpack.c.h.b16 %v743
    %v1318 = vunpack.c.l.b16 %v744
    %v1319 = vunpack.c.h.b16 %v744
    %v1320 = vunpack.c.l.b16 %v745
    %v1321 = vunpack.c.h.b16 %v745
    %v1322 = vunpack.c.l.b16 %v746
    %v1323 = vunpack.c.h.b16 %v746
    %v1324 = vunpack.c.l.b16 %v747
    %v1325 = vunpack.c.h.b16 %v747
    %v1326 = vunpack.c.l.b16 %v748
    %v1327 = vunpack.c.h.b16 %v748
    %v1328 = vunpack.c.l.b16 %v749
    %v1329 = vunpack.c.h.b16 %v749
    %v1330 = vunpack.c.l.b16 %v750
    %v1331 = vunpack.c.h.b16 %v750
    %v1332 = vunpack.c.l.b16 %v751
    %v1333 = vunpack.c.h.b16 %v751
    %v1334 = vunpack.c.l.b16 %v752
    %v1335 = vunpack.c.h.b16 %v752
    %v1336 = vunpack.c.l.b16 %v753
    %v1337 = vunpack.c.h.b16 %v753
    %v1338 = vunpack.c.l.b16 %v754
    %v1339 = vunpack.c.h.b16 %v754
    %v1340 = vunpack.c.l.b16 %v755
    %v1341 = vunpack.c.h.b16 %v755
    %v1342 = vunpack.c.l.b16 %v756
    %v1343 = vunpack.c.h.b16 %v756
    %v1344 = vunpack.c.l.b16 %v757
    %v1345 = vunpack.c.h.b16 %v757
    %v1346 = vunpack.c.l.b16 %v758
    %v1347 = vunpack.c.h.b16 %v758
    %v1348 = vunpack.c.l.b16 %v759
    %v1349 = vunpack.c.h.b16 %v759
    %v1350 = vunpack.c.l.b16 %v760
    %v1351 = vunpack.c.h.b16 %v760
    %v1352 = vunpack.c.l.b16 %v761
    %v1353 = vunpack.c.h.b16 %v761
    %v1354 = vunpack.c.l.b16 %v762
    %v1355 = vunpack.c.h.b16 %v762
    %v1356 = vunpack.c.l.b16 %v763
    %v1357 = vunpack.c.h.b16 %v763
    %v1358 = vunpack.c.l.b16 %v764
    %v1359 = vunpack.c.h.b16 %v764
    %v1360 = vunpack.c.l.b16 %v765
    %v1361 = vunpack.c.h.b16 %v765
    %v1362 = vunpack.c.l.b16 %v766
    %v1363 = vunpack.c.h.b16 %v766
    %v1364 = vunpack.c.l.b16 %v767
    %v1365 = vunpack.c.h.b16 %v767
    %v1366 = vunpack.c.l.b16 %v768
    %v1367 = vunpack.c.h.b16 %v768
    %v1368 = vunpack.c.l.b16 %v769
    %v1369 = vunpack.c.h.b16 %v769
    %v1370 = vunpack.c.l.b16 %v770
    %v1371 = vunpack.c.h.b16 %v770
    %v1372 = vunpack.c.l.b16 %v771
    %v1373 = vunpack.c.h.b16 %v771
    %v1374 = vunpack.c.l.b16 %v772
    %v1375 = vunpack.c.h.b16 %v772
    %v1376 = vunpack.c.l.b16 %v773
    %v1377 = vunpack.c.h.b16 %v773
    %v1378 = vunpack.c.l.b16 %v774
    %v1379 = vunpack.c.h.b16 %v774
    %v1380 = vunpack.c.l.b16 %v775
    %v1381 = vunpack.c.h.b16 %v775
    %v1382 = vunpack.c.l.b16 %v776
    %v1383 = vunpack.c.h.b16 %v776
    %v1384 = vunpack.c.l.b16 %v777
    %v1385 = vunpack.c.h.b16 %v777
    %v1386 = vpack.c.b16 %v1008, %v1002
    %v1387 = vpack.c.b16 %v1009, %v1003
    %v1388 = vpack.c.b16 %v1010, %v1004
    %v1389 = vpack.c.b16 %v1011, %v1005
    %v1390 = vpack.c.b16 %v1012, %v1006
    %v1391 = vpack.c.b16 %v1013, %v1007
    %v1392 = vpack.c.b16 %v1020, %v1014
    %v1393 = vpack.c.b16 %v1021, %v1015
    %v1394 = vpack.c.b16 %v1022, %v1016
    %v1395 = vpack.c.b16 %v1023, %v1017
    %v1396 = vpack.c.b16 %v1024, %v1018
    %v1397 = vpack.c.b16 %v1025, %v1019
    %v1398 = vpack.c.b16 %v1032, %v1026
    %v1399 = vpack.c.b16 %v1033, %v1027
    %v1400 = vpack.c.b16 %v1034, %v1028
    %v1401 = vpack.c.b16 %v1035, %v1029
    %v1402 = vpack.c.b16 %v1036, %v1030
    %v1403 = vpack.c.b16 %v1037, %v1031
    %v1404 = vpack.c.b16 %v1044, %v1038
    %v1405 = vpack.c.b16 %v1045, %v1039
    %v1406 = vpack.c.b16 %v1046, %v1040
    %v1407 = vpack.c.b16 %v1047, %v1041
    %v1408 = vpack.c.b16 %v1048, %v1042
    %v1409 = vpack.c.b16 %v1049, %v1043
    %v1410 = vpack.c.b16 %v1056, %v1050
    %v1411 = vpack.c.b16 %v1057, %v1051
    %v1412 = vpack.c.b16 %v1058, %v1052
    %v1413 = vpack.c.b16 %v1059, %v1053
    %v1414 = vpack.c.b16 %v1060, %v1054
    %v1415 = vpack.c.b16 %v1061, %v1055
    %v1416 = vpack.c.b16 %v1068, %v1062
    %v1417 = vpack.c.b16 %v1069, %v1063
    %v1418 = vpack.c.b16 %v1070, %v1064
    %v1419 = vpack.c.b16 %v1071, %v1065
    %v1420 = vpack.c.b16 %v1072, %v1066
    %v1421 = vpack.c.b16 %v1073, %v1067
    %v1422 = vpack.c.b16 %v1080, %v1074
    %v1423 = vpack.c.b16 %v1081, %v1075
    %v1424 = vpack.c.b16 %v1082, %v1076
    %v1425 = vpack.c.b16 %v1083, %v1077
    %v1426 = vpack.c.b16 %v1084, %v1078
    %v1427 = vpack.c.b16 %v1085, %v1079
    %v1428 = vpack.c.b16 %v1092, %v1086
    %v1429 = vpack.c.b16 %v1093, %v1087
    %v1430 = vpack.c.b16 %v1094, %v1088
    %v1431 = vpack.c.b16 %v1095, %v1089
    %v1432 = vpack.c.b16 %v1096, %v1090
    %v1433 = vpack.c.b16 %v1097, %v1091
    %v1434 = vpack.c.b16 %v1104, %v1098
    %v1435 = vpack.c.b16 %v1105, %v1099
    %v1436 = vpack.c.b16 %v1106, %v1100
    %v1437 = vpack.c.b16 %v1107, %v1101
    %v1438 = vpack.c.b16 %v1108, %v1102
    %v1439 = vpack.c.b16 %v1109, %v1103
    %v1440 = vpack.c.b16 %v1116, %v1110
    %v1441 = vpack.c.b16 %v1117, %v1111
    %v1442 = vpack.c.b16 %v1118, %v1112
    %v1443 = vpack.c.b16 %v1119, %v1113
    %v1444 = vpack.c.b16 %v1120, %v1114
    %v1445 = vpack.c.b16 %v1121, %v1115
    %v1446 = vpack.c.b16 %v1128, %v1122
    %v1447 = vpack.c.b16 %v1129, %v1123
    %v1448 = vpack.c.b16 %v1130, %v1124
    %v1449 = vpack.c.b16 %v1131, %v1125
    %v1450 = vpack.c.b16 %v1132, %v1126
    %v1451 = vpack.c.b16 %v1133, %v1127
    %v1452 = vpack.c.b16 %v1140, %v1134
    %v1453 = vpack.c.b16 %v1141, %v1135
    %v1454 = vpack.c.b16 %v1142, %v1136
    %v1455 = vpack.c.b16 %v1143, %v1137
    %v1456 = vpack.c.b16 %v1144, %v1138
    %v1457 = vpack.c.b16 %v1145, %v1139
    %v1458 = vpack.c.b16 %v1152, %v1146
    %v1459 = vpack.c.b16 %v1153, %v1147
    %v1460 = vpack.c.b16 %v1154, %v1148
    %v1461 = vpack.c.b16 %v1155, %v1149
    %v1462 = vpack.c.b16 %v1156, %v1150
    %v1463 = vpack.c.b16 %v1157, %v1151
    %v1464 = vpack.c.b16 %v1164, %v1158
    %v1465 = vpack.c.b16 %v1165, %v1159
    %v1466 = vpack.c.b16 %v1166, %v1160
    %v1467 = vpack.c.b16 %v1167, %v1161
    %v1468 = vpack.c.b16 %v1168, %v1162
    %v1469 = vpack.c.b16 %v1169, %v1163
    %v1470 = vpack.c.b16 %v1176, %v1170
    %v1471 = vpack.c.b16 %v1177, %v1171
    %v1472 = vpack.c.b16 %v1178, %v1172
    %v1473 = vpack.c.b16 %v1179, %v1173
    %v1474 = vpack.c.b16 %v1180, %v1174
    %v1475 = vpack.c.b16 %v1181, %v1175
    %v1476 = vpack.c.b16 %v1188, %v1182
    %v1477 = vpack.c.b16 %v1189, %v1183
    %v1478 = vpack.c.b16 %v1190, %v1184
    %v1479 = vpack.c.b16 %v1191, %v1185
    %v1480 = vpack.c.b16 %v1192, %v1186
    %v1481 = vpack.c.b16 %v1193, %v1187
    %v1482 = vpack.c.b16 %v1200, %v1194
    %v1483 = vpack.c.b16 %v1201, %v1195
    %v1484 = vpack.c.b16 %v1202, %v1196
    %v1485 = vpack.c.b16 %v1203, %v1197
    %v1486 = vpack.c.b16 %v1204, %v1198
    %v1487 = vpack.c.b16 %v1205, %v1199
    %v1488 = vpack.c.b16 %v1212, %v1206
    %v1489 = vpack.c.b16 %v1213, %v1207
    %v1490 = vpack.c.b16 %v1214, %v1208
    %v1491 = vpack.c.b16 %v1215, %v1209
    %v1492 = vpack.c.b16 %v1216, %v1210
    %v1493 = vpack.c.b16 %v1217, %v1211
    %v1494 = vpack.c.b16 %v1224, %v1218
    %v1495 = vpack.c.b16 %v1225, %v1219
    %v1496 = vpack.c.b16 %v1226, %v1220
    %v1497 = vpack.c.b16 %v1227, %v1221
    %v1498 = vpack.c.b16 %v1228, %v1222
    %v1499 = vpack.c.b16 %v1229, %v1223
    %v1500 = vpack.c.b16 %v1236, %v1230
    %v1501 = vpack.c.b16 %v1237, %v1231
    %v1502 = vpack.c.b16 %v1238, %v1232
    %v1503 = vpack.c.b16 %v1239, %v1233
    %v1504 = vpack.c.b16 %v1240, %v1234
    %v1505 = vpack.c.b16 %v1241, %v1235
    %v1506 = vpack.c.b16 %v1248, %v1242
    %v1507 = vpack.c.b16 %v1249, %v1243
    %v1508 = vpack.c.b16 %v1250, %v1244
    %v1509 = vpack.c.b16 %v1251, %v1245
    %v1510 = vpack.c.b16 %v1252, %v1246
    %v1511 = vpack.c.b16 %v1253, %v1247
    %v1512 = vpack.c.b16 %v1260, %v1254
    %v1513 = vpack.c.b16 %v1261, %v1255
    %v1514 = vpack.c.b16 %v1262, %v1256
    %v1515 = vpack.c.b16 %v1263, %v1257
    %v1516 = vpack.c.b16 %v1264, %v1258
    %v1517 = vpack.c.b16 %v1265, %v1259
    %v1518 = vpack.c.b16 %v1272, %v1266
    %v1519 = vpack.c.b16 %v1273, %v1267
    %v1520 = vpack.c.b16 %v1274, %v1268
    %v1521 = vpack.c.b16 %v1275, %v1269
    %v1522 = vpack.c.b16 %v1276, %v1270
    %v1523 = vpack.c.b16 %v1277, %v1271
    %v1524 = vpack.c.b16 %v1284, %v1278
    %v1525 = vpack.c.b16 %v1285, %v1279
    %v1526 = vpack.c.b16 %v1286, %v1280
    %v1527 = vpack.c.b16 %v1287, %v1281
    %v1528 = vpack.c.b16 %v1288, %v1282
    %v1529 = vpack.c.b16 %v1289, %v1283
    %v1530 = vpack.c.b16 %v1296, %v1290
    %v1531 = vpack.c.b16 %v1297, %v1291
    %v1532 = vpack.c.b16 %v1298, %v1292
    %v1533 = vpack.c.b16 %v1299, %v1293
    %v1534 = vpack.c.b16 %v1300, %v1294
    %v1535 = vpack.c.b16 %v1301, %v1295
    %v1536 = vpack.c.b16 %v1308, %v1302
    %v1537 = vpack.c.b16 %v1309, %v1303
    %v1538 = vpack.c.b16 %v1310, %v1304
    %v1539 = vpack.c.b16 %v1311, %v1305
    %v1540 = vpack.c.b16 %v1312, %v1306
    %v1541 = vpack.c.b16 %v1313, %v1307
    %v1542 = vpack.c.b16 %v1320, %v1314
    %v1543 = vpack.c.b16 %v1321, %v1315
    %v1544 = vpack.c.b16 %v1322, %v1316
    %v1545 = vpack.c.b16 %v1323, %v1317
    %v1546 = vpack.c.b16 %v1324, %v1318
    %v1547 = vpack.c.b16 %v1325, %v1319
    %v1548 = vpack.c.b16 %v1332, %v1326
    %v1549 = vpack.c.b16 %v1333, %v1327
    %v1550 = vpack.c.b16 %v1334, %v1328
    %v1551 = vpack.c.b16 %v1335, %v1329
    %v1552 = vpack.c.b16 %v1336, %v1330
    %v1553 = vpack.c.b16 %v1337, %v1331
    %v1554 = vpack.c.b16 %v1344, %v1338
    %v1555 = vpack.c.b16 %v1345, %v1339
    %v1556 = vpack.c.b16 %v1346, %v1340
    %v1557 = vpack.c.b16 %v1347, %v1341
    %v1558 = vpack.c.b16 %v1348, %v1342
    %v1559 = vpack.c.b16 %v1349, %v1343
    %v1560 = vpack.c.b16 %v1356, %v1350
    %v1561 = vpack.c.b16 %v1357, %v1351
    %v1562 = vpack.c.b16 %v1358, %v1352
    %v1563 = vpack.c.b16 %v1359, %v1353
    %v1564 = vpack.c.b16 %v1360, %v1354
    %v1565 = vpack.c.b16 %v1361, %v1355
    %v1566 = vpack.c.b16 %v1368, %v1362
    %v1567 = vpack.c.b16 %v1369, %v1363
    %v1568 = vpack.c.b16 %v1370, %v1364
    %v1569 = vpack.c.b16 %v1371, %v1365
    %v1570 = vpack.c.b16 %v1372, %v1366
    %v1571 = vpack.c.b16 %v1373, %v1367
    %v1572 = vpack.c.b16 %v1380, %v1374
    %v1573 = vpack.c.b16 %v1381, %v1375
    %v1574 = vpack.c.b16 %v1382, %v1376
    %v1575 = vpack.c.b16 %v1383, %v1377
    %v1576 = vpack.c.b16 %v1384, %v1378
    %v1577 = vpack.c.b16 %v1385, %v1379
    %1770 = vmatprep.subr.bf16.mxu0 %v1387
    %1771 = vmatpush1.bf16.msra.mxu0 %v1386
    %1772 = vmatprep.subr.bf16.mxu0 %v1393
    %1773 = vmatpush1.bf16.msra.mxu0 %v1392
    %1774 = vmatprep.subr.bf16.mxu0 %v1399
    %1775 = vmatpush1.bf16.msra.mxu0 %v1398
    %1776 = vmatprep.subr.bf16.mxu0 %v1405
    %1777 = vmatpush1.bf16.msra.mxu0 %v1404
    %1778 = vmatprep.subr.bf16.mxu0 %v1411
    %1779 = vmatpush1.bf16.msra.mxu0 %v1410
    %1780 = vmatprep.subr.bf16.mxu0 %v1417
    %1781 = vmatpush1.bf16.msra.mxu0 %v1416
    %1782 = vmatprep.subr.bf16.mxu0 %v1423
    %1783 = vmatpush1.bf16.msra.mxu0 %v1422
    %1784 = vmatprep.subr.bf16.mxu0 %v1429
    %1785 = vmatpush1.bf16.msra.mxu0 %v1428
    %1786 = vmatprep.subr.bf16.mxu0 %v1435
    %1787 = vmatpush1.bf16.msra.mxu0 %v1434
    %1788 = vmatprep.subr.bf16.mxu0 %v1441
    %1789 = vmatpush1.bf16.msra.mxu0 %v1440
    %1790 = vmatprep.subr.bf16.mxu0 %v1447
    %1791 = vmatpush1.bf16.msra.mxu0 %v1446
    %1792 = vmatprep.subr.bf16.mxu0 %v1453
    %1793 = vmatpush1.bf16.msra.mxu0 %v1452
    %1794 = vmatprep.subr.bf16.mxu0 %v1459
    %1795 = vmatpush1.bf16.msra.mxu0 %v1458
    %1796 = vmatprep.subr.bf16.mxu0 %v1465
    %1797 = vmatpush1.bf16.msra.mxu0 %v1464
    %1798 = vmatprep.subr.bf16.mxu0 %v1471
    %1799 = vmatpush1.bf16.msra.mxu0 %v1470
    %1800 = vmatprep.subr.bf16.mxu0 %v1477
    %1801 = vmatpush1.bf16.msra.mxu0 %v1476
    %1802 = vmatprep.mubr.bf16.mxu0 %v583
    %1803 = vmatmul.mubr.bf16.gmra.mrb[0].mxu0 %v582
    %v1804 = vpop.f32.mrb[0].mxu0
    %v1805 = vadd.f32 %v783, %v1804
    %v1806 = vpop.f32.mrb[0].mxu0
    %v1807 = vadd.f32 %v787, %v1806
    %v1808 = vpop.f32.mrb[0].mxu0
    %v1809 = vpop.f32.mrb[0].mxu0
    %1810 = vdwg.mxu0
    %1811 = vmatprep.subr.bf16.mxu0 %v1483
    %1812 = vmatpush1.bf16.msra.mxu0 %v1482
    %1813 = vmatprep.subr.bf16.mxu0 %v1489
    %1814 = vmatpush1.bf16.msra.mxu0 %v1488
    %1815 = vmatprep.subr.bf16.mxu0 %v1495
    %1816 = vmatpush1.bf16.msra.mxu0 %v1494
    %1817 = vmatprep.subr.bf16.mxu0 %v1501
    %1818 = vmatpush1.bf16.msra.mxu0 %v1500
    %1819 = vmatprep.subr.bf16.mxu0 %v1507
    %1820 = vmatpush1.bf16.msra.mxu0 %v1506
    %1821 = vmatprep.subr.bf16.mxu0 %v1513
    %1822 = vmatpush1.bf16.msra.mxu0 %v1512
    %1823 = vmatprep.subr.bf16.mxu0 %v1519
    %1824 = vmatpush1.bf16.msra.mxu0 %v1518
    %1825 = vmatprep.subr.bf16.mxu0 %v1525
    %1826 = vmatpush1.bf16.msra.mxu0 %v1524
    %1827 = vmatprep.subr.bf16.mxu0 %v1531
    %1828 = vmatpush1.bf16.msra.mxu0 %v1530
    %1829 = vmatprep.subr.bf16.mxu0 %v1537
    %1830 = vmatpush1.bf16.msra.mxu0 %v1536
    %1831 = vmatprep.subr.bf16.mxu0 %v1543
    %1832 = vmatpush1.bf16.msra.mxu0 %v1542
    %1833 = vmatprep.subr.bf16.mxu0 %v1549
    %1834 = vmatpush1.bf16.msra.mxu0 %v1548
    %1835 = vmatprep.subr.bf16.mxu0 %v1555
    %1836 = vmatpush1.bf16.msra.mxu0 %v1554
    %1837 = vmatprep.subr.bf16.mxu0 %v1561
    %1838 = vmatpush1.bf16.msra.mxu0 %v1560
    %1839 = vmatprep.subr.bf16.mxu0 %v1567
    %1840 = vmatpush1.bf16.msra.mxu0 %v1566
    %1841 = vmatprep.subr.bf16.mxu0 %v1573
    %1842 = vmatpush1.bf16.msra.mxu0 %v1572
    %1843 = vmatprep.mubr.bf16.mxu0 %v585
    %1844 = vmatmul.mubr.bf16.gmra.mrb[0].mxu0 %v584
    %v1845 = vpop.f32.mrb[0].mxu0
    %v1846 = vadd.f32 %v1805, %v1845
    %v1847 = vpop.f32.mrb[0].mxu0
    %v1848 = vadd.f32 %v1807, %v1847
    %v1849 = vpop.f32.mrb[0].mxu0
    %v1850 = vpop.f32.mrb[0].mxu0
    %1851 = vdwg.mxu0
    %1852 = vmatprep.subr.bf16.mxu0 %v1389
    %1853 = vmatpush1.bf16.msra.mxu0 %v1388
    %1854 = vmatprep.subr.bf16.mxu0 %v1395
    %1855 = vmatpush1.bf16.msra.mxu0 %v1394
    %1856 = vmatprep.subr.bf16.mxu0 %v1401
    %1857 = vmatpush1.bf16.msra.mxu0 %v1400
    %1858 = vmatprep.subr.bf16.mxu0 %v1407
    %1859 = vmatpush1.bf16.msra.mxu0 %v1406
    %1860 = vmatprep.subr.bf16.mxu0 %v1413
    %1861 = vmatpush1.bf16.msra.mxu0 %v1412
    %1862 = vmatprep.subr.bf16.mxu0 %v1419
    %1863 = vmatpush1.bf16.msra.mxu0 %v1418
    %1864 = vmatprep.subr.bf16.mxu0 %v1425
    %1865 = vmatpush1.bf16.msra.mxu0 %v1424
    %1866 = vmatprep.subr.bf16.mxu0 %v1431
    %1867 = vmatpush1.bf16.msra.mxu0 %v1430
    %1868 = vmatprep.subr.bf16.mxu0 %v1437
    %1869 = vmatpush1.bf16.msra.mxu0 %v1436
    %1870 = vmatprep.subr.bf16.mxu0 %v1443
    %1871 = vmatpush1.bf16.msra.mxu0 %v1442
    %1872 = vmatprep.subr.bf16.mxu0 %v1449
    %1873 = vmatpush1.bf16.msra.mxu0 %v1448
    %1874 = vmatprep.subr.bf16.mxu0 %v1455
    %1875 = vmatpush1.bf16.msra.mxu0 %v1454
    %1876 = vmatprep.subr.bf16.mxu0 %v1461
    %1877 = vmatpush1.bf16.msra.mxu0 %v1460
    %1878 = vmatprep.subr.bf16.mxu0 %v1467
    %1879 = vmatpush1.bf16.msra.mxu0 %v1466
    %1880 = vmatprep.subr.bf16.mxu0 %v1473
    %1881 = vmatpush1.bf16.msra.mxu0 %v1472
    %1882 = vmatprep.subr.bf16.mxu0 %v1479
    %1883 = vmatpush1.bf16.msra.mxu0 %v1478
    %1884 = vmatprep.mubr.bf16.mxu0 %v583
    %1885 = vmatmul.mubr.bf16.gmra.mrb[0].mxu0 %v582
    %v1886 = vpop.f32.mrb[0].mxu0
    %v1887 = vadd.f32 %v791, %v1886
    %v1888 = vpop.f32.mrb[0].mxu0
    %v1889 = vadd.f32 %v795, %v1888
    %v1890 = vpop.f32.mrb[0].mxu0
    %v1891 = vpop.f32.mrb[0].mxu0
    %1892 = vdwg.mxu0
    %1893 = vmatprep.subr.bf16.mxu0 %v1485
    %1894 = vmatpush1.bf16.msra.mxu0 %v1484
    %1895 = vmatprep.subr.bf16.mxu0 %v1491
    %1896 = vmatpush1.bf16.msra.mxu0 %v1490
    %1897 = vmatprep.subr.bf16.mxu0 %v1497
    %1898 = vmatpush1.bf16.msra.mxu0 %v1496
    %1899 = vmatprep.subr.bf16.mxu0 %v1503
    %1900 = vmatpush1.bf16.msra.mxu0 %v1502
    %1901 = vmatprep.subr.bf16.mxu0 %v1509
    %1902 = vmatpush1.bf16.msra.mxu0 %v1508
    %1903 = vmatprep.subr.bf16.mxu0 %v1515
    %1904 = vmatpush1.bf16.msra.mxu0 %v1514
    %1905 = vmatprep.subr.bf16.mxu0 %v1521
    %1906 = vmatpush1.bf16.msra.mxu0 %v1520
    %1907 = vmatprep.subr.bf16.mxu0 %v1527
    %1908 = vmatpush1.bf16.msra.mxu0 %v1526
    %1909 = vmatprep.subr.bf16.mxu0 %v1533
    %1910 = vmatpush1.bf16.msra.mxu0 %v1532
    %1911 = vmatprep.subr.bf16.mxu0 %v1539
    %1912 = vmatpush1.bf16.msra.mxu0 %v1538
    %1913 = vmatprep.subr.bf16.mxu0 %v1545
    %1914 = vmatpush1.bf16.msra.mxu0 %v1544
    %1915 = vmatprep.subr.bf16.mxu0 %v1551
    %1916 = vmatpush1.bf16.msra.mxu0 %v1550
    %1917 = vmatprep.subr.bf16.mxu0 %v1557
    %1918 = vmatpush1.bf16.msra.mxu0 %v1556
    %1919 = vmatprep.subr.bf16.mxu0 %v1563
    %1920 = vmatpush1.bf16.msra.mxu0 %v1562
    %1921 = vmatprep.subr.bf16.mxu0 %v1569
    %1922 = vmatpush1.bf16.msra.mxu0 %v1568
    %1923 = vmatprep.subr.bf16.mxu0 %v1575
    %1924 = vmatpush1.bf16.msra.mxu0 %v1574
    %1925 = vmatprep.mubr.bf16.mxu0 %v585
    %1926 = vmatmul.mubr.bf16.gmra.mrb[0].mxu0 %v584
    %v1927 = vpop.f32.mrb[0].mxu0
    %v1928 = vadd.f32 %v1887, %v1927
    %v1929 = vpop.f32.mrb[0].mxu0
    %v1930 = vadd.f32 %v1889, %v1929
    %v1931 = vpop.f32.mrb[0].mxu0
    %v1932 = vpop.f32.mrb[0].mxu0
    %1933 = vdwg.mxu0
    %1934 = vmatprep.subr.bf16.mxu0 %v1391
    %1935 = vmatpush1.bf16.msra.mxu0 %v1390
    %1936 = vmatprep.subr.bf16.mxu0 %v1397
    %1937 = vmatpush1.bf16.msra.mxu0 %v1396
    %1938 = vmatprep.subr.bf16.mxu0 %v1403
    %1939 = vmatpush1.bf16.msra.mxu0 %v1402
    %1940 = vmatprep.subr.bf16.mxu0 %v1409
    %1941 = vmatpush1.bf16.msra.mxu0 %v1408
    %1942 = vmatprep.subr.bf16.mxu0 %v1415
    %1943 = vmatpush1.bf16.msra.mxu0 %v1414
    %1944 = vmatprep.subr.bf16.mxu0 %v1421
    %1945 = vmatpush1.bf16.msra.mxu0 %v1420
    %1946 = vmatprep.subr.bf16.mxu0 %v1427
    %1947 = vmatpush1.bf16.msra.mxu0 %v1426
    %1948 = vmatprep.subr.bf16.mxu0 %v1433
    %1949 = vmatpush1.bf16.msra.mxu0 %v1432
    %1950 = vmatprep.subr.bf16.mxu0 %v1439
    %1951 = vmatpush1.bf16.msra.mxu0 %v1438
    %1952 = vmatprep.subr.bf16.mxu0 %v1445
    %1953 = vmatpush1.bf16.msra.mxu0 %v1444
    %1954 = vmatprep.subr.bf16.mxu0 %v1451
    %1955 = vmatpush1.bf16.msra.mxu0 %v1450
    %1956 = vmatprep.subr.bf16.mxu0 %v1457
    %1957 = vmatpush1.bf16.msra.mxu0 %v1456
    %1958 = vmatprep.subr.bf16.mxu0 %v1463
    %1959 = vmatpush1.bf16.msra.mxu0 %v1462
    %1960 = vmatprep.subr.bf16.mxu0 %v1469
    %1961 = vmatpush1.bf16.msra.mxu0 %v1468
    %1962 = vmatprep.subr.bf16.mxu0 %v1475
    %1963 = vmatpush1.bf16.msra.mxu0 %v1474
    %1964 = vmatprep.subr.bf16.mxu0 %v1481
    %1965 = vmatpush1.bf16.msra.mxu0 %v1480
    %1966 = vmatprep.mubr.bf16.mxu0 %v583
    %1967 = vmatmul.mubr.bf16.gmra.mrb[0].mxu0 %v582
    %v1968 = vpop.f32.mrb[0].mxu0
    %v1969 = vadd.f32 %v799, %v1968
    %v1970 = vpop.f32.mrb[0].mxu0
    %v1971 = vadd.f32 %v803, %v1970
    %v1972 = vpop.f32.mrb[0].mxu0
    %v1973 = vpop.f32.mrb[0].mxu0
    %1974 = vdwg.mxu0
    %1975 = vmatprep.subr.bf16.mxu0 %v1487
    %1976 = vmatpush1.bf16.msra.mxu0 %v1486
    %1977 = vmatprep.subr.bf16.mxu0 %v1493
    %1978 = vmatpush1.bf16.msra.mxu0 %v1492
    %1979 = vmatprep.subr.bf16.mxu0 %v1499
    %1980 = vmatpush1.bf16.msra.mxu0 %v1498
    %1981 = vmatprep.subr.bf16.mxu0 %v1505
    %1982 = vmatpush1.bf16.msra.mxu0 %v1504
    %1983 = vmatprep.subr.bf16.mxu0 %v1511
    %1984 = vmatpush1.bf16.msra.mxu0 %v1510
    %1985 = vmatprep.subr.bf16.mxu0 %v1517
    %1986 = vmatpush1.bf16.msra.mxu0 %v1516
    %1987 = vmatprep.subr.bf16.mxu0 %v1523
    %1988 = vmatpush1.bf16.msra.mxu0 %v1522
    %1989 = vmatprep.subr.bf16.mxu0 %v1529
    %1990 = vmatpush1.bf16.msra.mxu0 %v1528
    %1991 = vmatprep.subr.bf16.mxu0 %v1535
    %1992 = vmatpush1.bf16.msra.mxu0 %v1534
    %1993 = vmatprep.subr.bf16.mxu0 %v1541
    %1994 = vmatpush1.bf16.msra.mxu0 %v1540
    %1995 = vmatprep.subr.bf16.mxu0 %v1547
    %1996 = vmatpush1.bf16.msra.mxu0 %v1546
    %1997 = vmatprep.subr.bf16.mxu0 %v1553
    %1998 = vmatpush1.bf16.msra.mxu0 %v1552
    %1999 = vmatprep.subr.bf16.mxu0 %v1559
    %2000 = vmatpush1.bf16.msra.mxu0 %v1558
    %2001 = vmatprep.subr.bf16.mxu0 %v1565
    %2002 = vmatpush1.bf16.msra.mxu0 %v1564
    %2003 = vmatprep.subr.bf16.mxu0 %v1571
    %2004 = vmatpush1.bf16.msra.mxu0 %v1570
    %2005 = vmatprep.subr.bf16.mxu0 %v1577
    %2006 = vmatpush1.bf16.msra.mxu0 %v1576
    %2007 = vmatprep.mubr.bf16.mxu0 %v585
    %2008 = vmatmul.mubr.bf16.gmra.mrb[0].mxu0 %v584
    %v2009 = vpop.f32.mrb[0].mxu0
    %v2010 = vadd.f32 %v1969, %v2009
    %v2011 = vpop.f32.mrb[0].mxu0
    %v2012 = vadd.f32 %v1971, %v2011
    %v2013 = vpop.f32.mrb[0].mxu0
    %v2014 = vpop.f32.mrb[0].mxu0
    %2015 = vdwg.mxu0
    %v2016 = vmax.f32 %v1846, 0.0
    %v2017 = vmax.f32 %v1848, 0.0
    %v2018 = vmax.f32 %v1928, 0.0
    %v2019 = vmax.f32 %v1930, 0.0
    %v2020 = vmax.f32 %v2010, 0.0
    %v2021 = vmax.f32 %v2012, 0.0
    %v2022 = vpack.c.bf16 %v2016, %v2016
    %v2023 = vpack.c.bf16 %v2017, %v2017
    %v2024 = vpack.c.bf16 %v2018, %v2018
    %v2025 = vpack.c.bf16 %v2019, %v2019
    %v2026 = vpack.c.bf16 %v2020, %v2020
    %v2027 = vpack.c.bf16 %v2021, %v2021
    %v2028 = vld [vmem:[#allocation8] sm:$0xf]
    %v2029 = vld [vmem:[#allocation8 + $0x4] sm:$0xf]
    %v2030 = vld [vmem:[#allocation8 + $0x8] sm:$0xf]
    %v2031 = vld [vmem:[#allocation8 + $0xc] sm:$0xf]
    %v2032 = vld [vmem:[#allocation8 + $0x10] sm:$0xf]
    %v2033 = vld [vmem:[#allocation8 + $0x14] sm:$0xf]
    %v2034 = vld [vmem:[#allocation8 + $0x18] sm:$0xf]
    %v2035 = vld [vmem:[#allocation8 + $0x1c] sm:$0xf]
    %v2036 = vld [vmem:[#allocation8 + $0x20] sm:$0xf]
    %v2037 = vld [vmem:[#allocation8 + $0x24] sm:$0xf]
    %v2038 = vld [vmem:[#allocation8 + $0x28] sm:$0xf]
    %v2039 = vld [vmem:[#allocation8 + $0x2c] sm:$0xf]
    %v2040 = vld [vmem:[#allocation8 + $0x30] sm:$0xf]
    %v2041 = vld [vmem:[#allocation8 + $0x34] sm:$0xf]
    %v2042 = vld [vmem:[#allocation8 + $0x38] sm:$0xf]
    %v2043 = vld [vmem:[#allocation8 + $0x3c] sm:$0xf]
    %v2044 = vld [vmem:[#allocation8 + $0x40] sm:$0xf]
    %v2045 = vld [vmem:[#allocation8 + $0x44] sm:$0xf]
    %v2046 = vld [vmem:[#allocation8 + $0x48] sm:$0xf]
    %v2047 = vld [vmem:[#allocation8 + $0x4c] sm:$0xf]
    %v2048 = vld [vmem:[#allocation8 + $0x50] sm:$0xf]
    %v2049 = vld [vmem:[#allocation8 + $0x54] sm:$0xf]
    %v2050 = vld [vmem:[#allocation8 + $0x58] sm:$0xf]
    %v2051 = vld [vmem:[#allocation8 + $0x5c] sm:$0xf]
    %v2052 = vld [vmem:[#allocation8 + $0x60] sm:$0xf]
    %v2053 = vld [vmem:[#allocation8 + $0x64] sm:$0xf]
    %v2054 = vld [vmem:[#allocation8 + $0x68] sm:$0xf]
    %v2055 = vld [vmem:[#allocation8 + $0x6c] sm:$0xf]
    %v2056 = vld [vmem:[#allocation8 + $0x70] sm:$0xf]
    %v2057 = vld [vmem:[#allocation8 + $0x74] sm:$0xf]
    %v2058 = vld [vmem:[#allocation8 + $0x78] sm:$0xf]
    %v2059 = vld [vmem:[#allocation8 + $0x7c] sm:$0xf]
    %v2060 = vld [vmem:[#allocation8 + $0x80] sm:$0xf]
    %v2061 = vld [vmem:[#allocation8 + $0x84] sm:$0xf]
    %v2062 = vld [vmem:[#allocation8 + $0x88] sm:$0xf]
    %v2063 = vld [vmem:[#allocation8 + $0x8c] sm:$0xf]
    %v2064 = vld [vmem:[#allocation8 + $0x90] sm:$0xf]
    %v2065 = vld [vmem:[#allocation8 + $0x94] sm:$0xf]
    %v2066 = vld [vmem:[#allocation8 + $0x98] sm:$0xf]
    %v2067 = vld [vmem:[#allocation8 + $0x9c] sm:$0xf]
    %v2068 = vld [vmem:[#allocation8 + $0xa0] sm:$0xf]
    %v2069 = vld [vmem:[#allocation8 + $0xa4] sm:$0xf]
    %v2070 = vld [vmem:[#allocation8 + $0xa8] sm:$0xf]
    %v2071 = vld [vmem:[#allocation8 + $0xac] sm:$0xf]
    %v2072 = vld [vmem:[#allocation8 + $0xb0] sm:$0xf]
    %v2073 = vld [vmem:[#allocation8 + $0xb4] sm:$0xf]
    %v2074 = vld [vmem:[#allocation8 + $0xb8] sm:$0xf]
    %v2075 = vld [vmem:[#allocation8 + $0xbc] sm:$0xf]
    %v2076 = vld [vmem:[#allocation8 + $0xc0] sm:$0xf]
    %v2077 = vld [vmem:[#allocation8 + $0xc4] sm:$0xf]
    %v2078 = vld [vmem:[#allocation8 + $0xc8] sm:$0xf]
    %v2079 = vld [vmem:[#allocation8 + $0xcc] sm:$0xf]
    %v2080 = vld [vmem:[#allocation8 + $0xd0] sm:$0xf]
    %v2081 = vld [vmem:[#allocation8 + $0xd4] sm:$0xf]
    %v2082 = vld [vmem:[#allocation8 + $0xd8] sm:$0xf]
    %v2083 = vld [vmem:[#allocation8 + $0xdc] sm:$0xf]
    %v2084 = vld [vmem:[#allocation8 + $0xe0] sm:$0xf]
    %v2085 = vld [vmem:[#allocation8 + $0xe4] sm:$0xf]
    %v2086 = vld [vmem:[#allocation8 + $0xe8] sm:$0xf]
    %v2087 = vld [vmem:[#allocation8 + $0xec] sm:$0xf]
    %v2088 = vld [vmem:[#allocation8 + $0xf0] sm:$0xf]
    %v2089 = vld [vmem:[#allocation8 + $0xf4] sm:$0xf]
    %v2090 = vld [vmem:[#allocation8 + $0xf8] sm:$0xf]
    %v2091 = vld [vmem:[#allocation8 + $0xfc] sm:$0xf]
    %v2092 = vld [vmem:[#allocation8 + $0x100] sm:$0xf]
    %v2093 = vld [vmem:[#allocation8 + $0x104] sm:$0xf]
    %v2094 = vld [vmem:[#allocation8 + $0x108] sm:$0xf]
    %v2095 = vld [vmem:[#allocation8 + $0x10c] sm:$0xf]
    %v2096 = vld [vmem:[#allocation8 + $0x110] sm:$0xf]
    %v2097 = vld [vmem:[#allocation8 + $0x114] sm:$0xf]
    %v2098 = vld [vmem:[#allocation8 + $0x118] sm:$0xf]
    %v2099 = vld [vmem:[#allocation8 + $0x11c] sm:$0xf]
    %v2100 = vld [vmem:[#allocation8 + $0x120] sm:$0xf]
    %v2101 = vld [vmem:[#allocation8 + $0x124] sm:$0xf]
    %v2102 = vld [vmem:[#allocation8 + $0x128] sm:$0xf]
    %v2103 = vld [vmem:[#allocation8 + $0x12c] sm:$0xf]
    %v2104 = vld [vmem:[#allocation8 + $0x130] sm:$0xf]
    %v2105 = vld [vmem:[#allocation8 + $0x134] sm:$0xf]
    %v2106 = vld [vmem:[#allocation8 + $0x138] sm:$0xf]
    %v2107 = vld [vmem:[#allocation8 + $0x13c] sm:$0xf]
    %v2108 = vld [vmem:[#allocation8 + $0x140] sm:$0xf]
    %v2109 = vld [vmem:[#allocation8 + $0x144] sm:$0xf]
    %v2110 = vld [vmem:[#allocation8 + $0x148] sm:$0xf]
    %v2111 = vld [vmem:[#allocation8 + $0x14c] sm:$0xf]
    %v2112 = vld [vmem:[#allocation8 + $0x150] sm:$0xf]
    %v2113 = vld [vmem:[#allocation8 + $0x154] sm:$0xf]
    %v2114 = vld [vmem:[#allocation8 + $0x158] sm:$0xf]
    %v2115 = vld [vmem:[#allocation8 + $0x15c] sm:$0xf]
    %v2116 = vld [vmem:[#allocation8 + $0x160] sm:$0xf]
    %v2117 = vld [vmem:[#allocation8 + $0x164] sm:$0xf]
    %v2118 = vld [vmem:[#allocation8 + $0x168] sm:$0xf]
    %v2119 = vld [vmem:[#allocation8 + $0x16c] sm:$0xf]
    %v2120 = vld [vmem:[#allocation8 + $0x170] sm:$0xf]
    %v2121 = vld [vmem:[#allocation8 + $0x174] sm:$0xf]
    %v2122 = vld [vmem:[#allocation8 + $0x178] sm:$0xf]
    %v2123 = vld [vmem:[#allocation8 + $0x17c] sm:$0xf]
    %v2124 = vld [vmem:[%s6] sm:$0x1]
    %v2126 = vlaneseq
    %v2127 = vshrl.u32 %v2126, 7
    %v2128 = vsub.s32 0, %v2127
    %v2129 = vrot.slane %v2124, %v2128
    %v2227 = vunpack.c.l.b16 %v2028
    %v2228 = vunpack.c.l.b16 %v2029
    %v2229 = vunpack.c.l.b16 %v2030
    %v2230 = vunpack.c.l.b16 %v2031
    %v2231 = vunpack.c.l.b16 %v2032
    %v2232 = vunpack.c.l.b16 %v2033
    %v2233 = vunpack.c.l.b16 %v2034
    %v2234 = vunpack.c.l.b16 %v2035
    %v2235 = vunpack.c.l.b16 %v2036
    %v2236 = vunpack.c.l.b16 %v2037
    %v2237 = vunpack.c.l.b16 %v2038
    %v2238 = vunpack.c.l.b16 %v2039
    %v2239 = vunpack.c.l.b16 %v2040
    %v2240 = vunpack.c.l.b16 %v2041
    %v2241 = vunpack.c.l.b16 %v2042
    %v2242 = vunpack.c.l.b16 %v2043
    %v2243 = vunpack.c.l.b16 %v2044
    %v2244 = vunpack.c.l.b16 %v2045
    %v2245 = vunpack.c.l.b16 %v2046
    %v2246 = vunpack.c.l.b16 %v2047
    %v2247 = vunpack.c.l.b16 %v2048
    %v2248 = vunpack.c.l.b16 %v2049
    %v2249 = vunpack.c.l.b16 %v2050
    %v2250 = vunpack.c.l.b16 %v2051
    %v2251 = vunpack.c.l.b16 %v2052
    %v2252 = vunpack.c.l.b16 %v2053
    %v2253 = vunpack.c.l.b16 %v2054
    %v2254 = vunpack.c.l.b16 %v2055
    %v2255 = vunpack.c.l.b16 %v2056
    %v2256 = vunpack.c.l.b16 %v2057
    %v2257 = vunpack.c.l.b16 %v2058
    %v2258 = vunpack.c.l.b16 %v2059
    %v2259 = vunpack.c.l.b16 %v2060
    %v2260 = vunpack.c.l.b16 %v2061
    %v2261 = vunpack.c.l.b16 %v2062
    %v2262 = vunpack.c.l.b16 %v2063
    %v2263 = vunpack.c.l.b16 %v2064
    %v2264 = vunpack.c.l.b16 %v2065
    %v2265 = vunpack.c.l.b16 %v2066
    %v2266 = vunpack.c.l.b16 %v2067
    %v2267 = vunpack.c.l.b16 %v2068
    %v2268 = vunpack.c.l.b16 %v2069
    %v2269 = vunpack.c.l.b16 %v2070
    %v2270 = vunpack.c.l.b16 %v2071
    %v2271 = vunpack.c.l.b16 %v2072
    %v2272 = vunpack.c.l.b16 %v2073
    %v2273 = vunpack.c.l.b16 %v2074
    %v2274 = vunpack.c.l.b16 %v2075
    %v2275 = vunpack.c.l.b16 %v2076
    %v2276 = vunpack.c.l.b16 %v2077
    %v2277 = vunpack.c.l.b16 %v2078
    %v2278 = vunpack.c.l.b16 %v2079
    %v2279 = vunpack.c.l.b16 %v2080
    %v2280 = vunpack.c.l.b16 %v2081
    %v2281 = vunpack.c.l.b16 %v2082
    %v2282 = vunpack.c.l.b16 %v2083
    %v2283 = vunpack.c.l.b16 %v2084
    %v2284 = vunpack.c.l.b16 %v2085
    %v2285 = vunpack.c.l.b16 %v2086
    %v2286 = vunpack.c.l.b16 %v2087
    %v2287 = vunpack.c.l.b16 %v2088
    %v2288 = vunpack.c.l.b16 %v2089
    %v2289 = vunpack.c.l.b16 %v2090
    %v2290 = vunpack.c.l.b16 %v2091
    %v2291 = vunpack.c.l.b16 %v2092
    %v2292 = vunpack.c.l.b16 %v2093
    %v2293 = vunpack.c.l.b16 %v2094
    %v2294 = vunpack.c.l.b16 %v2095
    %v2295 = vunpack.c.l.b16 %v2096
    %v2296 = vunpack.c.l.b16 %v2097
    %v2297 = vunpack.c.l.b16 %v2098
    %v2298 = vunpack.c.l.b16 %v2099
    %v2299 = vunpack.c.l.b16 %v2100
    %v2300 = vunpack.c.l.b16 %v2101
    %v2301 = vunpack.c.l.b16 %v2102
    %v2302 = vunpack.c.l.b16 %v2103
    %v2303 = vunpack.c.l.b16 %v2104
    %v2304 = vunpack.c.l.b16 %v2105
    %v2305 = vunpack.c.l.b16 %v2106
    %v2306 = vunpack.c.l.b16 %v2107
    %v2307 = vunpack.c.l.b16 %v2108
    %v2308 = vunpack.c.l.b16 %v2109
    %v2309 = vunpack.c.l.b16 %v2110
    %v2310 = vunpack.c.l.b16 %v2111
    %v2311 = vunpack.c.l.b16 %v2112
    %v2312 = vunpack.c.l.b16 %v2113
    %v2313 = vunpack.c.l.b16 %v2114
    %v2314 = vunpack.c.l.b16 %v2115
    %v2315 = vunpack.c.l.b16 %v2116
    %v2316 = vunpack.c.l.b16 %v2117
    %v2317 = vunpack.c.l.b16 %v2118
    %v2318 = vunpack.c.l.b16 %v2119
    %v2319 = vunpack.c.l.b16 %v2120
    %v2320 = vunpack.c.l.b16 %v2121
    %v2321 = vunpack.c.l.b16 %v2122
    %v2322 = vunpack.c.l.b16 %v2123
    %v2323 = vpack.c.b16 %v2228, %v2227
    %v2324 = vpack.c.b16 %v2230, %v2229
    %v2325 = vpack.c.b16 %v2232, %v2231
    %v2326 = vpack.c.b16 %v2234, %v2233
    %v2327 = vpack.c.b16 %v2236, %v2235
    %v2328 = vpack.c.b16 %v2238, %v2237
    %v2329 = vpack.c.b16 %v2240, %v2239
    %v2330 = vpack.c.b16 %v2242, %v2241
    %v2331 = vpack.c.b16 %v2244, %v2243
    %v2332 = vpack.c.b16 %v2246, %v2245
    %v2333 = vpack.c.b16 %v2248, %v2247
    %v2334 = vpack.c.b16 %v2250, %v2249
    %v2335 = vpack.c.b16 %v2252, %v2251
    %v2336 = vpack.c.b16 %v2254, %v2253
    %v2337 = vpack.c.b16 %v2256, %v2255
    %v2338 = vpack.c.b16 %v2258, %v2257
    %v2339 = vpack.c.b16 %v2260, %v2259
    %v2340 = vpack.c.b16 %v2262, %v2261
    %v2341 = vpack.c.b16 %v2264, %v2263
    %v2342 = vpack.c.b16 %v2266, %v2265
    %v2343 = vpack.c.b16 %v2268, %v2267
    %v2344 = vpack.c.b16 %v2270, %v2269
    %v2345 = vpack.c.b16 %v2272, %v2271
    %v2346 = vpack.c.b16 %v2274, %v2273
    %v2347 = vpack.c.b16 %v2276, %v2275
    %v2348 = vpack.c.b16 %v2278, %v2277
    %v2349 = vpack.c.b16 %v2280, %v2279
    %v2350 = vpack.c.b16 %v2282, %v2281
    %v2351 = vpack.c.b16 %v2284, %v2283
    %v2352 = vpack.c.b16 %v2286, %v2285
    %v2353 = vpack.c.b16 %v2288, %v2287
    %v2354 = vpack.c.b16 %v2290, %v2289
    %v2355 = vpack.c.b16 %v2292, %v2291
    %v2356 = vpack.c.b16 %v2294, %v2293
    %v2357 = vpack.c.b16 %v2296, %v2295
    %v2358 = vpack.c.b16 %v2298, %v2297
    %v2359 = vpack.c.b16 %v2300, %v2299
    %v2360 = vpack.c.b16 %v2302, %v2301
    %v2361 = vpack.c.b16 %v2304, %v2303
    %v2362 = vpack.c.b16 %v2306, %v2305
    %v2363 = vpack.c.b16 %v2308, %v2307
    %v2364 = vpack.c.b16 %v2310, %v2309
    %v2365 = vpack.c.b16 %v2312, %v2311
    %v2366 = vpack.c.b16 %v2314, %v2313
    %v2367 = vpack.c.b16 %v2316, %v2315
    %v2368 = vpack.c.b16 %v2318, %v2317
    %v2369 = vpack.c.b16 %v2320, %v2319
    %v2370 = vpack.c.b16 %v2322, %v2321
    %2419 = vmatprep.subr.bf16.mxu0 0
    %2420 = vmatpush1.bf16.msra.mxu0 %v2323
    %2421 = vmatprep.subr.bf16.mxu0 0
    %2422 = vmatpush1.bf16.msra.mxu0 %v2324
    %2423 = vmatprep.subr.bf16.mxu0 0
    %2424 = vmatpush1.bf16.msra.mxu0 %v2325
    %2425 = vmatprep.subr.bf16.mxu0 0
    %2426 = vmatpush1.bf16.msra.mxu0 %v2326
    %2427 = vmatprep.subr.bf16.mxu0 0
    %2428 = vmatpush1.bf16.msra.mxu0 %v2327
    %2429 = vmatprep.subr.bf16.mxu0 0
    %2430 = vmatpush1.bf16.msra.mxu0 %v2328
    %2431 = vmatprep.subr.bf16.mxu0 0
    %2432 = vmatpush1.bf16.msra.mxu0 %v2329
    %2433 = vmatprep.subr.bf16.mxu0 0
    %2434 = vmatpush1.bf16.msra.mxu0 %v2330
    %2435 = vmatprep.subr.bf16.mxu0 0
    %2436 = vmatpush1.bf16.msra.mxu0 %v2331
    %2437 = vmatprep.subr.bf16.mxu0 0
    %2438 = vmatpush1.bf16.msra.mxu0 %v2332
    %2439 = vmatprep.subr.bf16.mxu0 0
    %2440 = vmatpush1.bf16.msra.mxu0 %v2333
    %2441 = vmatprep.subr.bf16.mxu0 0
    %2442 = vmatpush1.bf16.msra.mxu0 %v2334
    %2443 = vmatprep.subr.bf16.mxu0 0
    %2444 = vmatpush1.bf16.msra.mxu0 %v2335
    %2445 = vmatprep.subr.bf16.mxu0 0
    %2446 = vmatpush1.bf16.msra.mxu0 %v2336
    %2447 = vmatprep.subr.bf16.mxu0 0
    %2448 = vmatpush1.bf16.msra.mxu0 %v2337
    %2449 = vmatprep.subr.bf16.mxu0 0
    %2450 = vmatpush1.bf16.msra.mxu0 %v2338
    %2451 = vmatprep.mubr.bf16.mxu0 %v2023
    %2452 = vmatmul.mubr.bf16.gmra.mrb[0].mxu0 %v2022
    %v2453 = vpop.f32.mrb[0].mxu0
    %v2454 = vadd.f32 %v2129, %v2453
    %v2455 = vpop.f32.mrb[0].mxu0
    %v2456 = vpop.f32.mrb[0].mxu0
    %v2457 = vpop.f32.mrb[0].mxu0
    %2458 = vdwg.mxu0
    %2459 = vmatprep.subr.bf16.mxu0 0
    %2460 = vmatpush1.bf16.msra.mxu0 %v2339
    %2461 = vmatprep.subr.bf16.mxu0 0
    %2462 = vmatpush1.bf16.msra.mxu0 %v2340
    %2463 = vmatprep.subr.bf16.mxu0 0
    %2464 = vmatpush1.bf16.msra.mxu0 %v2341
    %2465 = vmatprep.subr.bf16.mxu0 0
    %2466 = vmatpush1.bf16.msra.mxu0 %v2342
    %2467 = vmatprep.subr.bf16.mxu0 0
    %2468 = vmatpush1.bf16.msra.mxu0 %v2343
    %2469 = vmatprep.subr.bf16.mxu0 0
    %2470 = vmatpush1.bf16.msra.mxu0 %v2344
    %2471 = vmatprep.subr.bf16.mxu0 0
    %2472 = vmatpush1.bf16.msra.mxu0 %v2345
    %2473 = vmatprep.subr.bf16.mxu0 0
    %2474 = vmatpush1.bf16.msra.mxu0 %v2346
    %2475 = vmatprep.subr.bf16.mxu0 0
    %2476 = vmatpush1.bf16.msra.mxu0 %v2347
    %2477 = vmatprep.subr.bf16.mxu0 0
    %2478 = vmatpush1.bf16.msra.mxu0 %v2348
    %2479 = vmatprep.subr.bf16.mxu0 0
    %2480 = vmatpush1.bf16.msra.mxu0 %v2349
    %2481 = vmatprep.subr.bf16.mxu0 0
    %2482 = vmatpush1.bf16.msra.mxu0 %v2350
    %2483 = vmatprep.subr.bf16.mxu0 0
    %2484 = vmatpush1.bf16.msra.mxu0 %v2351
    %2485 = vmatprep.subr.bf16.mxu0 0
    %2486 = vmatpush1.bf16.msra.mxu0 %v2352
    %2487 = vmatprep.subr.bf16.mxu0 0
    %2488 = vmatpush1.bf16.msra.mxu0 %v2353
    %2489 = vmatprep.subr.bf16.mxu0 0
    %2490 = vmatpush1.bf16.msra.mxu0 %v2354
    %2491 = vmatprep.mubr.bf16.mxu0 %v2025
    %2492 = vmatmul.mubr.bf16.gmra.mrb[0].mxu0 %v2024
    %v2493 = vpop.f32.mrb[0].mxu0
    %v2494 = vadd.f32 %v2454, %v2493
    %v2495 = vpop.f32.mrb[0].mxu0
    %v2496 = vpop.f32.mrb[0].mxu0
    %v2497 = vpop.f32.mrb[0].mxu0
    %2498 = vdwg.mxu0
    %2499 = vmatprep.subr.bf16.mxu0 0
    %2500 = vmatpush1.bf16.msra.mxu0 %v2355
    %2501 = vmatprep.subr.bf16.mxu0 0
    %2502 = vmatpush1.bf16.msra.mxu0 %v2356
    %2503 = vmatprep.subr.bf16.mxu0 0
    %2504 = vmatpush1.bf16.msra.mxu0 %v2357
    %2505 = vmatprep.subr.bf16.mxu0 0
    %2506 = vmatpush1.bf16.msra.mxu0 %v2358
    %2507 = vmatprep.subr.bf16.mxu0 0
    %2508 = vmatpush1.bf16.msra.mxu0 %v2359
    %2509 = vmatprep.subr.bf16.mxu0 0
    %2510 = vmatpush1.bf16.msra.mxu0 %v2360
    %2511 = vmatprep.subr.bf16.mxu0 0
    %2512 = vmatpush1.bf16.msra.mxu0 %v2361
    %2513 = vmatprep.subr.bf16.mxu0 0
    %2514 = vmatpush1.bf16.msra.mxu0 %v2362
    %2515 = vmatprep.subr.bf16.mxu0 0
    %2516 = vmatpush1.bf16.msra.mxu0 %v2363
    %2517 = vmatprep.subr.bf16.mxu0 0
    %2518 = vmatpush1.bf16.msra.mxu0 %v2364
    %2519 = vmatprep.subr.bf16.mxu0 0
    %2520 = vmatpush1.bf16.msra.mxu0 %v2365
    %2521 = vmatprep.subr.bf16.mxu0 0
    %2522 = vmatpush1.bf16.msra.mxu0 %v2366
    %2523 = vmatprep.subr.bf16.mxu0 0
    %2524 = vmatpush1.bf16.msra.mxu0 %v2367
    %2525 = vmatprep.subr.bf16.mxu0 0
    %2526 = vmatpush1.bf16.msra.mxu0 %v2368
    %2527 = vmatprep.subr.bf16.mxu0 0
    %2528 = vmatpush1.bf16.msra.mxu0 %v2369
    %2529 = vmatprep.subr.bf16.mxu0 0
    %2530 = vmatpush1.bf16.msra.mxu0 %v2370
    %2531 = vmatprep.mubr.bf16.mxu0 %v2027
    %2532 = vmatmul.mubr.bf16.gmra.mrb[0].mxu0 %v2026
    %v2533 = vpop.f32.mrb[0].mxu0
    %v2534 = vadd.f32 %v2494, %v2533
    %v2535 = vpop.f32.mrb[0].mxu0
    %v2536 = vpop.f32.mrb[0].mxu0
    %v2537 = vpop.f32.mrb[0].mxu0
    %2538 = vdwg.mxu0
    %2539 = vst [vmem:[#allocation10] sm:$0xff] %v2534
    // Predicated region
    $region46: #{tpu_custom_call.1} parent=1 // pred_check
      _
    $region47: #{tpu_custom_call.1} parent=1 // pred_check_branch
      %2541 = sbr.rel (0) target = $region49
    $region48: #{tpu_custom_call.1} parent=1 // pred_region
      %s2543 = ssub.s32 128, 128
      %2544 = vsyncadd [#allocation4], %s2543
      %s2546 = sshll.u32 [#allocation10], 4
      %s2547 = int_to_ptr.vmem [resolvable:$true] %s2546
      %2549 = dma.vmem_to_hbm [thread:$0]  %s2547, 128, %s7, [#allocation4]
    $region49: #{tpu_custom_call.1} parent=1 // pred_fallthru
      _
    // Predicated region
    $region50: #{tpu_custom_call.1} parent=1 // pred_check
      _
    $region51: #{tpu_custom_call.1} parent=1 // pred_check_branch
      %2551 = sbr.rel (0) target = $region53
    $region52: #{tpu_custom_call.1} parent=1 // pred_region
      %2552 = dma.done [#allocation4], 128
    $region53: #{tpu_custom_call.1} parent=1 // pred_fallthru
      _
    %2553 = vsyncpa [#allocation3], 1
    %2554 = vsyncpa [#allocation6], 1
    %2555 = vsyncpa [#allocation9], 1
    %2556 = vsyncpa [#allocation4], 1

</llo_original>
